<compile_context>
chip_gen: v7x
topology: tpu7x:2x2x1
jax: 0.10.0
libtpu: 0.0.40
codegen_flags: <defaults>
</compile_context>

<pallas_src>
import functools

import numpy as np
import jax
import jax.numpy as jnp
from jax.experimental import pallas as pl
from jax.experimental.pallas import tpu as pltpu


# --------------------------------------------------------------------------
# Fused kernel: all layers + projection, single invocation (no grid).
#   refs layout: [x, (wih, whh, b) * num_layers, wp, bp, out, act_scratch,
#                 gate_scratch]
# --------------------------------------------------------------------------
def lstm_net_kernel(*refs, num_layers, T, B, H):
    x_ref = refs[0]
    wp_ref = refs[1 + 3 * num_layers]
    bp_ref = refs[2 + 3 * num_layers]
    out_ref = refs[3 + 3 * num_layers]
    act_ref = refs[4 + 3 * num_layers]   # VMEM (T*B, H): per-layer hidden seq
    gx_ref = refs[5 + 3 * num_layers]    # VMEM (T*B, 4H): hoisted input gates

    layer_in = x_ref[...]                                   # (T*B, D_in)

    for l in range(num_layers):
        wih_ref = refs[1 + 3 * l]
        whh_ref = refs[2 + 3 * l]
        b_ref = refs[3 + 3 * l]

        # Hoisted input projection + bias: one MXU matmul for all T steps.
        gx_ref[...] = (
            jnp.dot(layer_in, wih_ref[...], preferred_element_type=jnp.float32)
            + b_ref[...]
        )                                                    # (T*B, 4H)

        whh = whh_ref[...]                                   # (H, 4H)
        h = jnp.zeros((B, H), jnp.float32)                   # loop-carried vregs
        c = jnp.zeros((B, H), jnp.float32)

        # Serial recurrence; T is static -> fully unrolled, h/c stay in vregs.
        for t in range(T):
            g = gx_ref[pl.ds(t * B, B), :] + jnp.dot(
                h, whh, preferred_element_type=jnp.float32)  # (B, 4H)
            i_g = jax.nn.sigmoid(g[:, 0:H])
            f_g = jax.nn.sigmoid(g[:, H:2 * H])
            g_g = jnp.tanh(g[:, 2 * H:3 * H])
            o_g = jax.nn.sigmoid(g[:, 3 * H:4 * H])
            c = f_g * c + i_g * g_g
            h = o_g * jnp.tanh(c)
            act_ref[pl.ds(t * B, B), :] = h                  # VMEM only

        layer_in = act_ref[...]                              # (T*B, H)

    # Fused projection epilogue; single HBM store of the whole output slab.
    out_ref[...] = (
        jnp.dot(layer_in, wp_ref[...], preferred_element_type=jnp.float32)
        + bp_ref[...]
    ).astype(out_ref.dtype)


# --------------------------------------------------------------------------
# Full LSTMNet forward (PyTorch batch_first semantics).
# --------------------------------------------------------------------------
@jax.jit
def lstm_net_forward(x, params):
    """x: (B, T, n_input_channel) -> (B, T, n_output_channel)."""
    B, T, Din = x.shape
    layers = params["layers"]
    num_layers = len(layers)
    H = layers[0][1].shape[0]
    O = params["proj_w_t"].shape[1]

    # time-major rows: row index = t*B + b
    x2d = jnp.transpose(x, (1, 0, 2)).reshape(T * B, Din)

    flat_inputs = [x2d]
    in_specs = [pl.BlockSpec((T * B, Din), lambda: (0, 0))]
    for (wih_t, whh_t, bias) in layers:
        flat_inputs += [wih_t, whh_t, bias]
        in_specs += [
            pl.BlockSpec(wih_t.shape, lambda: (0, 0)),
            pl.BlockSpec(whh_t.shape, lambda: (0, 0)),
            pl.BlockSpec(bias.shape, lambda: (0, 0)),
        ]
    flat_inputs += [params["proj_w_t"], params["proj_b"]]
    in_specs += [
        pl.BlockSpec(params["proj_w_t"].shape, lambda: (0, 0)),
        pl.BlockSpec(params["proj_b"].shape, lambda: (0, 0)),
    ]

    kernel = functools.partial(
        lstm_net_kernel, num_layers=num_layers, T=T, B=B, H=H)

    out2d = pl.pallas_call(
        kernel,
        out_shape=jax.ShapeDtypeStruct((T * B, O), jnp.float32),
        in_specs=in_specs,
        out_specs=pl.BlockSpec((T * B, O), lambda: (0, 0)),
        scratch_shapes=[
            pltpu.VMEM((T * B, H), jnp.float32),        # hidden-seq buffer
            pltpu.VMEM((T * B, 4 * H), jnp.float32),    # hoisted input gates
        ],
    )(*flat_inputs)

    return jnp.transpose(out2d.reshape(T, B, O), (1, 0, 2))


# --------------------------------------------------------------------------
# Deterministic parameter init (PyTorch-style uniform(-1/sqrt(H), 1/sqrt(H))).
# --------------------------------------------------------------------------
def init_params(key, hidden_size, num_layers, n_in, n_out):
    bound = 1.0 / np.sqrt(hidden_size)
    layers = []
    for l in range(num_layers):
        d_in = n_in if l == 0 else hidden_size
        key, k1, k2, k3, k4 = jax.random.split(key, 5)
        w_ih = jax.random.uniform(k1, (4 * hidden_size, d_in), jnp.float32, -bound, bound)
        w_hh = jax.random.uniform(k2, (4 * hidden_size, hidden_size), jnp.float32, -bound, bound)
        b_ih = jax.random.uniform(k3, (4 * hidden_size,), jnp.float32, -bound, bound)
        b_hh = jax.random.uniform(k4, (4 * hidden_size,), jnp.float32, -bound, bound)
        layers.append((w_ih.T, w_hh.T, (b_ih + b_hh).reshape(1, -1)))
    key, k5, k6 = jax.random.split(key, 3)
    w_p = jax.random.uniform(k5, (n_out, hidden_size), jnp.float32, -bound, bound)
    b_p = jax.random.uniform(k6, (n_out,), jnp.float32, -bound, bound)
    return {"layers": layers, "proj_w_t": w_p.T, "proj_b": b_p.reshape(1, -1)}


# --------------------------------------------------------------------------
# float64 numpy reference (PyTorch LSTM semantics) for correctness check.
# --------------------------------------------------------------------------
def reference_forward_np(x, params):
    def sig(z):
        return 1.0 / (1.0 + np.exp(-z))

    h_seq = np.transpose(np.asarray(x, np.float64), (1, 0, 2))   # (T, B, D)
    for (wih_t, whh_t, bias) in params["layers"]:
        wih = np.asarray(wih_t, np.float64)
        whh = np.asarray(whh_t, np.float64)
        b = np.asarray(bias, np.float64)
        H = whh.shape[0]
        T, B, _ = h_seq.shape
        h = np.zeros((B, H), np.float64)
        c = np.zeros((B, H), np.float64)
        outs = []
        for t in range(T):
            g = h_seq[t] @ wih + h @ whh + b
            i = sig(g[:, 0:H])
            f = sig(g[:, H:2 * H])
            gg = np.tanh(g[:, 2 * H:3 * H])
            o = sig(g[:, 3 * H:4 * H])
            c = f * c + i * gg
            h = o * np.tanh(c)
            outs.append(h)
        h_seq = np.stack(outs, axis=0)
    out = h_seq @ np.asarray(params["proj_w_t"], np.float64) \
        + np.asarray(params["proj_b"], np.float64)
    return np.transpose(out, (1, 0, 2))


if __name__ == "__main__":
    # Module config: hidden_size=32, num_layers=2, n_input_channel=4,
    # n_output_channel=4 (dof / nD are unused in forward).
    hidden_size, num_layers = 32, 2
    n_in, n_out = 4, 4
    B, T = 2, 8

    key = jax.random.PRNGKey(0)
    key, kx = jax.random.split(key)
    x = jax.random.normal(kx, (B, T, n_in), jnp.float32)
    params = init_params(key, hidden_size, num_layers, n_in, n_out)

    out = lstm_net_forward(x, params)
    out = jax.block_until_ready(out)

    ref = reference_forward_np(x, params)
    assert out.shape == (B, T, n_out)
    # DEFAULT MXU precision rounds matmul operands to bf16; accumulated through
    # the 2-layer recurrence this gives ~1e-3 absolute deviation vs float64.
    # Semantic bugs (gate order / bias / transpose) would produce O(1) errors.
    assert np.allclose(np.asarray(out), ref, rtol=1e-2, atol=1e-2), \
        "mismatch vs reference"

    print("KERNEL_OK")
</pallas_src>

<mosaic_0001>
module attributes {stable_mosaic.version = 11 : i64} {
  func.func @lstm_net_kernel(%arg0: memref<16x4xf32, #tpu.memory_space<vmem>>, %arg1: memref<4x128xf32, #tpu.memory_space<vmem>>, %arg2: memref<32x128xf32, #tpu.memory_space<vmem>>, %arg3: memref<1x128xf32, #tpu.memory_space<vmem>>, %arg4: memref<32x128xf32, #tpu.memory_space<vmem>>, %arg5: memref<32x128xf32, #tpu.memory_space<vmem>>, %arg6: memref<1x128xf32, #tpu.memory_space<vmem>>, %arg7: memref<32x4xf32, #tpu.memory_space<vmem>>, %arg8: memref<1x4xf32, #tpu.memory_space<vmem>>, %arg9: memref<16x4xf32, #tpu.memory_space<vmem>>, %arg10: memref<16x32xf32, #tpu.memory_space<vmem>>, %arg11: memref<16x128xf32, #tpu.memory_space<vmem>>) attributes {dimension_semantics = [], scalar_prefetch = 0 : i64, scratch_operands = 2 : i64, tpu.core_type = #tpu.core_type<tc>} {
    %c0 = arith.constant 0 : index
    %c0_0 = arith.constant 0 : index
    %0 = vector.load %arg0[%c0, %c0_0] : memref<16x4xf32, #tpu.memory_space<vmem>>, vector<16x4xf32>
    %c0_1 = arith.constant 0 : index
    %c0_2 = arith.constant 0 : index
    %1 = vector.load %arg1[%c0_1, %c0_2] : memref<4x128xf32, #tpu.memory_space<vmem>>, vector<4x128xf32>
    %cst = arith.constant dense<0.000000e+00> : vector<16x128xf32>
    %2 = tpu.matmul %0, %1, %cst {dimension_numbers = #tpu.dot_dimension_numbers<[1], [0], [0], [1], [0, 0, 1, 1], [], []>} : vector<16x4xf32>, vector<4x128xf32>, vector<16x128xf32> -> vector<16x128xf32>
    %c0_3 = arith.constant 0 : index
    %c0_4 = arith.constant 0 : index
    %3 = vector.load %arg3[%c0_3, %c0_4] : memref<1x128xf32, #tpu.memory_space<vmem>>, vector<1x128xf32>
    %4 = vector.broadcast %3 : vector<1x128xf32> to vector<16x128xf32>
    %5 = arith.addf %2, %4 : vector<16x128xf32>
    %c0_5 = arith.constant 0 : index
    %c0_6 = arith.constant 0 : index
    %6 = vector.load %arg11[%c0_5, %c0_6] : memref<16x128xf32, #tpu.memory_space<vmem>>, vector<16x128xf32>
    tpu.vector_store %arg11[%c0_5, %c0_6], %5 {strides = array<i32>} : memref<16x128xf32, #tpu.memory_space<vmem>>, vector<16x128xf32>,
    %c0_7 = arith.constant 0 : index
    %c0_8 = arith.constant 0 : index
    %7 = vector.load %arg2[%c0_7, %c0_8] : memref<32x128xf32, #tpu.memory_space<vmem>>, vector<32x128xf32>
    %cst_9 = arith.constant 0.000000e+00 : f32
    %8 = vector.broadcast %cst_9 : f32 to vector<2x32xf32>
    %cst_10 = arith.constant 0.000000e+00 : f32
    %9 = vector.broadcast %cst_10 : f32 to vector<2x32xf32>
    %c0_11 = arith.constant 0 : index
    %c0_12 = arith.constant 0 : index
    %10 = vector.load %arg11[%c0_11, %c0_12] : memref<16x128xf32, #tpu.memory_space<vmem>>, vector<2x128xf32>
    %cst_13 = arith.constant dense<0.000000e+00> : vector<2x128xf32>
    %11 = tpu.matmul %8, %7, %cst_13 {dimension_numbers = #tpu.dot_dimension_numbers<[1], [0], [0], [1], [0, 0, 1, 1], [], []>} : vector<2x32xf32>, vector<32x128xf32>, vector<2x128xf32> -> vector<2x128xf32>
    %12 = arith.addf %10, %11 : vector<2x128xf32>
    %13 = vector.extract_strided_slice %12 {offsets = [0, 0], sizes = [2, 32], strides = [1, 1]} : vector<2x128xf32> to vector<2x32xf32>
    %14 = arith.negf %13 : vector<2x32xf32>
    %15 = math.exp %14 : vector<2x32xf32>
    %cst_14 = arith.constant 1.000000e+00 : f32
    %16 = vector.broadcast %cst_14 : f32 to vector<2x32xf32>
    %17 = arith.addf %16, %15 : vector<2x32xf32>
    %18 = arith.divf %16, %17 : vector<2x32xf32>
    %19 = vector.extract_strided_slice %12 {offsets = [0, 32], sizes = [2, 32], strides = [1, 1]} : vector<2x128xf32> to vector<2x32xf32>
    %20 = arith.negf %19 : vector<2x32xf32>
    %21 = math.exp %20 : vector<2x32xf32>
    %cst_15 = arith.constant 1.000000e+00 : f32
    %22 = vector.broadcast %cst_15 : f32 to vector<2x32xf32>
    %23 = arith.addf %22, %21 : vector<2x32xf32>
    %24 = arith.divf %22, %23 : vector<2x32xf32>
    %25 = vector.extract_strided_slice %12 {offsets = [0, 64], sizes = [2, 32], strides = [1, 1]} : vector<2x128xf32> to vector<2x32xf32>
    %26 = math.tanh %25 : vector<2x32xf32>
    %27 = vector.extract_strided_slice %12 {offsets = [0, 96], sizes = [2, 32], strides = [1, 1]} : vector<2x128xf32> to vector<2x32xf32>
    %28 = arith.negf %27 : vector<2x32xf32>
    %29 = math.exp %28 : vector<2x32xf32>
    %cst_16 = arith.constant 1.000000e+00 : f32
    %30 = vector.broadcast %cst_16 : f32 to vector<2x32xf32>
    %31 = arith.addf %30, %29 : vector<2x32xf32>
    %32 = arith.divf %30, %31 : vector<2x32xf32>
    %33 = arith.mulf %24, %9 : vector<2x32xf32>
    %34 = arith.mulf %18, %26 : vector<2x32xf32>
    %35 = arith.addf %33, %34 : vector<2x32xf32>
    %36 = math.tanh %35 : vector<2x32xf32>
    %37 = arith.mulf %32, %36 : vector<2x32xf32>
    %c0_17 = arith.constant 0 : index
    %c0_18 = arith.constant 0 : index
    %38 = vector.load %arg10[%c0_17, %c0_18] : memref<16x32xf32, #tpu.memory_space<vmem>>, vector<2x32xf32>
    tpu.vector_store %arg10[%c0_17, %c0_18], %37 {strides = array<i32>} : memref<16x32xf32, #tpu.memory_space<vmem>>, vector<2x32xf32>,
    %c2 = arith.constant 2 : index
    %c0_19 = arith.constant 0 : index
    %39 = vector.load %arg11[%c2, %c0_19] : memref<16x128xf32, #tpu.memory_space<vmem>>, vector<2x128xf32>
    %cst_20 = arith.constant dense<0.000000e+00> : vector<2x128xf32>
    %40 = tpu.matmul %37, %7, %cst_20 {dimension_numbers = #tpu.dot_dimension_numbers<[1], [0], [0], [1], [0, 0, 1, 1], [], []>} : vector<2x32xf32>, vector<32x128xf32>, vector<2x128xf32> -> vector<2x128xf32>
    %41 = arith.addf %39, %40 : vector<2x128xf32>
    %42 = vector.extract_strided_slice %41 {offsets = [0, 0], sizes = [2, 32], strides = [1, 1]} : vector<2x128xf32> to vector<2x32xf32>
    %43 = arith.negf %42 : vector<2x32xf32>
    %44 = math.exp %43 : vector<2x32xf32>
    %cst_21 = arith.constant 1.000000e+00 : f32
    %45 = vector.broadcast %cst_21 : f32 to vector<2x32xf32>
    %46 = arith.addf %45, %44 : vector<2x32xf32>
    %47 = arith.divf %45, %46 : vector<2x32xf32>
    %48 = vector.extract_strided_slice %41 {offsets = [0, 32], sizes = [2, 32], strides = [1, 1]} : vector<2x128xf32> to vector<2x32xf32>
    %49 = arith.negf %48 : vector<2x32xf32>
    %50 = math.exp %49 : vector<2x32xf32>
    %cst_22 = arith.constant 1.000000e+00 : f32
    %51 = vector.broadcast %cst_22 : f32 to vector<2x32xf32>
    %52 = arith.addf %51, %50 : vector<2x32xf32>
    %53 = arith.divf %51, %52 : vector<2x32xf32>
    %54 = vector.extract_strided_slice %41 {offsets = [0, 64], sizes = [2, 32], strides = [1, 1]} : vector<2x128xf32> to vector<2x32xf32>
    %55 = math.tanh %54 : vector<2x32xf32>
    %56 = vector.extract_strided_slice %41 {offsets = [0, 96], sizes = [2, 32], strides = [1, 1]} : vector<2x128xf32> to vector<2x32xf32>
    %57 = arith.negf %56 : vector<2x32xf32>
    %58 = math.exp %57 : vector<2x32xf32>
    %cst_23 = arith.constant 1.000000e+00 : f32
    %59 = vector.broadcast %cst_23 : f32 to vector<2x32xf32>
    %60 = arith.addf %59, %58 : vector<2x32xf32>
    %61 = arith.divf %59, %60 : vector<2x32xf32>
    %62 = arith.mulf %53, %35 : vector<2x32xf32>
    %63 = arith.mulf %47, %55 : vector<2x32xf32>
    %64 = arith.addf %62, %63 : vector<2x32xf32>
    %65 = math.tanh %64 : vector<2x32xf32>
    %66 = arith.mulf %61, %65 : vector<2x32xf32>
    %c2_24 = arith.constant 2 : index
    %c0_25 = arith.constant 0 : index
    %67 = vector.load %arg10[%c2_24, %c0_25] : memref<16x32xf32, #tpu.memory_space<vmem>>, vector<2x32xf32>
    tpu.vector_store %arg10[%c2_24, %c0_25], %66 {strides = array<i32>} : memref<16x32xf32, #tpu.memory_space<vmem>>, vector<2x32xf32>,
    %c4 = arith.constant 4 : index
    %c0_26 = arith.constant 0 : index
    %68 = vector.load %arg11[%c4, %c0_26] : memref<16x128xf32, #tpu.memory_space<vmem>>, vector<2x128xf32>
    %cst_27 = arith.constant dense<0.000000e+00> : vector<2x128xf32>
    %69 = tpu.matmul %66, %7, %cst_27 {dimension_numbers = #tpu.dot_dimension_numbers<[1], [0], [0], [1], [0, 0, 1, 1], [], []>} : vector<2x32xf32>, vector<32x128xf32>, vector<2x128xf32> -> vector<2x128xf32>
    %70 = arith.addf %68, %69 : vector<2x128xf32>
    %71 = vector.extract_strided_slice %70 {offsets = [0, 0], sizes = [2, 32], strides = [1, 1]} : vector<2x128xf32> to vector<2x32xf32>
    %72 = arith.negf %71 : vector<2x32xf32>
    %73 = math.exp %72 : vector<2x32xf32>
    %cst_28 = arith.constant 1.000000e+00 : f32
    %74 = vector.broadcast %cst_28 : f32 to vector<2x32xf32>
    %75 = arith.addf %74, %73 : vector<2x32xf32>
    %76 = arith.divf %74, %75 : vector<2x32xf32>
    %77 = vector.extract_strided_slice %70 {offsets = [0, 32], sizes = [2, 32], strides = [1, 1]} : vector<2x128xf32> to vector<2x32xf32>
    %78 = arith.negf %77 : vector<2x32xf32>
    %79 = math.exp %78 : vector<2x32xf32>
    %cst_29 = arith.constant 1.000000e+00 : f32
    %80 = vector.broadcast %cst_29 : f32 to vector<2x32xf32>
    %81 = arith.addf %80, %79 : vector<2x32xf32>
    %82 = arith.divf %80, %81 : vector<2x32xf32>
    %83 = vector.extract_strided_slice %70 {offsets = [0, 64], sizes = [2, 32], strides = [1, 1]} : vector<2x128xf32> to vector<2x32xf32>
    %84 = math.tanh %83 : vector<2x32xf32>
    %85 = vector.extract_strided_slice %70 {offsets = [0, 96], sizes = [2, 32], strides = [1, 1]} : vector<2x128xf32> to vector<2x32xf32>
    %86 = arith.negf %85 : vector<2x32xf32>
    %87 = math.exp %86 : vector<2x32xf32>
    %cst_30 = arith.constant 1.000000e+00 : f32
    %88 = vector.broadcast %cst_30 : f32 to vector<2x32xf32>
    %89 = arith.addf %88, %87 : vector<2x32xf32>
    %90 = arith.divf %88, %89 : vector<2x32xf32>
    %91 = arith.mulf %82, %64 : vector<2x32xf32>
    %92 = arith.mulf %76, %84 : vector<2x32xf32>
    %93 = arith.addf %91, %92 : vector<2x32xf32>
    %94 = math.tanh %93 : vector<2x32xf32>
    %95 = arith.mulf %90, %94 : vector<2x32xf32>
    %c4_31 = arith.constant 4 : index
    %c0_32 = arith.constant 0 : index
    %96 = vector.load %arg10[%c4_31, %c0_32] : memref<16x32xf32, #tpu.memory_space<vmem>>, vector<2x32xf32>
    tpu.vector_store %arg10[%c4_31, %c0_32], %95 {strides = array<i32>} : memref<16x32xf32, #tpu.memory_space<vmem>>, vector<2x32xf32>,
    %c6 = arith.constant 6 : index
    %c0_33 = arith.constant 0 : index
    %97 = vector.load %arg11[%c6, %c0_33] : memref<16x128xf32, #tpu.memory_space<vmem>>, vector<2x128xf32>
    %cst_34 = arith.constant dense<0.000000e+00> : vector<2x128xf32>
    %98 = tpu.matmul %95, %7, %cst_34 {dimension_numbers = #tpu.dot_dimension_numbers<[1], [0], [0], [1], [0, 0, 1, 1], [], []>} : vector<2x32xf32>, vector<32x128xf32>, vector<2x128xf32> -> vector<2x128xf32>
    %99 = arith.addf %97, %98 : vector<2x128xf32>
    %100 = vector.extract_strided_slice %99 {offsets = [0, 0], sizes = [2, 32], strides = [1, 1]} : vector<2x128xf32> to vector<2x32xf32>
    %101 = arith.negf %100 : vector<2x32xf32>
    %102 = math.exp %101 : vector<2x32xf32>
    %cst_35 = arith.constant 1.000000e+00 : f32
    %103 = vector.broadcast %cst_35 : f32 to vector<2x32xf32>
    %104 = arith.addf %103, %102 : vector<2x32xf32>
    %105 = arith.divf %103, %104 : vector<2x32xf32>
    %106 = vector.extract_strided_slice %99 {offsets = [0, 32], sizes = [2, 32], strides = [1, 1]} : vector<2x128xf32> to vector<2x32xf32>
    %107 = arith.negf %106 : vector<2x32xf32>
    %108 = math.exp %107 : vector<2x32xf32>
    %cst_36 = arith.constant 1.000000e+00 : f32
    %109 = vector.broadcast %cst_36 : f32 to vector<2x32xf32>
    %110 = arith.addf %109, %108 : vector<2x32xf32>
    %111 = arith.divf %109, %110 : vector<2x32xf32>
    %112 = vector.extract_strided_slice %99 {offsets = [0, 64], sizes = [2, 32], strides = [1, 1]} : vector<2x128xf32> to vector<2x32xf32>
    %113 = math.tanh %112 : vector<2x32xf32>
    %114 = vector.extract_strided_slice %99 {offsets = [0, 96], sizes = [2, 32], strides = [1, 1]} : vector<2x128xf32> to vector<2x32xf32>
    %115 = arith.negf %114 : vector<2x32xf32>
    %116 = math.exp %115 : vector<2x32xf32>
    %cst_37 = arith.constant 1.000000e+00 : f32
    %117 = vector.broadcast %cst_37 : f32 to vector<2x32xf32>
    %118 = arith.addf %117, %116 : vector<2x32xf32>
    %119 = arith.divf %117, %118 : vector<2x32xf32>
    %120 = arith.mulf %111, %93 : vector<2x32xf32>
    %121 = arith.mulf %105, %113 : vector<2x32xf32>
    %122 = arith.addf %120, %121 : vector<2x32xf32>
    %123 = math.tanh %122 : vector<2x32xf32>
    %124 = arith.mulf %119, %123 : vector<2x32xf32>
    %c6_38 = arith.constant 6 : index
    %c0_39 = arith.constant 0 : index
    %125 = vector.load %arg10[%c6_38, %c0_39] : memref<16x32xf32, #tpu.memory_space<vmem>>, vector<2x32xf32>
    tpu.vector_store %arg10[%c6_38, %c0_39], %124 {strides = array<i32>} : memref<16x32xf32, #tpu.memory_space<vmem>>, vector<2x32xf32>,
    %c8 = arith.constant 8 : index
    %c0_40 = arith.constant 0 : index
    %126 = vector.load %arg11[%c8, %c0_40] : memref<16x128xf32, #tpu.memory_space<vmem>>, vector<2x128xf32>
    %cst_41 = arith.constant dense<0.000000e+00> : vector<2x128xf32>
    %127 = tpu.matmul %124, %7, %cst_41 {dimension_numbers = #tpu.dot_dimension_numbers<[1], [0], [0], [1], [0, 0, 1, 1], [], []>} : vector<2x32xf32>, vector<32x128xf32>, vector<2x128xf32> -> vector<2x128xf32>
    %128 = arith.addf %126, %127 : vector<2x128xf32>
    %129 = vector.extract_strided_slice %128 {offsets = [0, 0], sizes = [2, 32], strides = [1, 1]} : vector<2x128xf32> to vector<2x32xf32>
    %130 = arith.negf %129 : vector<2x32xf32>
    %131 = math.exp %130 : vector<2x32xf32>
    %cst_42 = arith.constant 1.000000e+00 : f32
    %132 = vector.broadcast %cst_42 : f32 to vector<2x32xf32>
    %133 = arith.addf %132, %131 : vector<2x32xf32>
    %134 = arith.divf %132, %133 : vector<2x32xf32>
    %135 = vector.extract_strided_slice %128 {offsets = [0, 32], sizes = [2, 32], strides = [1, 1]} : vector<2x128xf32> to vector<2x32xf32>
    %136 = arith.negf %135 : vector<2x32xf32>
    %137 = math.exp %136 : vector<2x32xf32>
    %cst_43 = arith.constant 1.000000e+00 : f32
    %138 = vector.broadcast %cst_43 : f32 to vector<2x32xf32>
    %139 = arith.addf %138, %137 : vector<2x32xf32>
    %140 = arith.divf %138, %139 : vector<2x32xf32>
    %141 = vector.extract_strided_slice %128 {offsets = [0, 64], sizes = [2, 32], strides = [1, 1]} : vector<2x128xf32> to vector<2x32xf32>
    %142 = math.tanh %141 : vector<2x32xf32>
    %143 = vector.extract_strided_slice %128 {offsets = [0, 96], sizes = [2, 32], strides = [1, 1]} : vector<2x128xf32> to vector<2x32xf32>
    %144 = arith.negf %143 : vector<2x32xf32>
    %145 = math.exp %144 : vector<2x32xf32>
    %cst_44 = arith.constant 1.000000e+00 : f32
    %146 = vector.broadcast %cst_44 : f32 to vector<2x32xf32>
    %147 = arith.addf %146, %145 : vector<2x32xf32>
    %148 = arith.divf %146, %147 : vector<2x32xf32>
    %149 = arith.mulf %140, %122 : vector<2x32xf32>
    %150 = arith.mulf %134, %142 : vector<2x32xf32>
    %151 = arith.addf %149, %150 : vector<2x32xf32>
    %152 = math.tanh %151 : vector<2x32xf32>
    %153 = arith.mulf %148, %152 : vector<2x32xf32>
    %c8_45 = arith.constant 8 : index
    %c0_46 = arith.constant 0 : index
    %154 = vector.load %arg10[%c8_45, %c0_46] : memref<16x32xf32, #tpu.memory_space<vmem>>, vector<2x32xf32>
    tpu.vector_store %arg10[%c8_45, %c0_46], %153 {strides = array<i32>} : memref<16x32xf32, #tpu.memory_space<vmem>>, vector<2x32xf32>,
    %c10 = arith.constant 10 : index
    %c0_47 = arith.constant 0 : index
    %155 = vector.load %arg11[%c10, %c0_47] : memref<16x128xf32, #tpu.memory_space<vmem>>, vector<2x128xf32>
    %cst_48 = arith.constant dense<0.000000e+00> : vector<2x128xf32>
    %156 = tpu.matmul %153, %7, %cst_48 {dimension_numbers = #tpu.dot_dimension_numbers<[1], [0], [0], [1], [0, 0, 1, 1], [], []>} : vector<2x32xf32>, vector<32x128xf32>, vector<2x128xf32> -> vector<2x128xf32>
    %157 = arith.addf %155, %156 : vector<2x128xf32>
    %158 = vector.extract_strided_slice %157 {offsets = [0, 0], sizes = [2, 32], strides = [1, 1]} : vector<2x128xf32> to vector<2x32xf32>
    %159 = arith.negf %158 : vector<2x32xf32>
    %160 = math.exp %159 : vector<2x32xf32>
    %cst_49 = arith.constant 1.000000e+00 : f32
    %161 = vector.broadcast %cst_49 : f32 to vector<2x32xf32>
    %162 = arith.addf %161, %160 : vector<2x32xf32>
    %163 = arith.divf %161, %162 : vector<2x32xf32>
    %164 = vector.extract_strided_slice %157 {offsets = [0, 32], sizes = [2, 32], strides = [1, 1]} : vector<2x128xf32> to vector<2x32xf32>
    %165 = arith.negf %164 : vector<2x32xf32>
    %166 = math.exp %165 : vector<2x32xf32>
    %cst_50 = arith.constant 1.000000e+00 : f32
    %167 = vector.broadcast %cst_50 : f32 to vector<2x32xf32>
    %168 = arith.addf %167, %166 : vector<2x32xf32>
    %169 = arith.divf %167, %168 : vector<2x32xf32>
    %170 = vector.extract_strided_slice %157 {offsets = [0, 64], sizes = [2, 32], strides = [1, 1]} : vector<2x128xf32> to vector<2x32xf32>
    %171 = math.tanh %170 : vector<2x32xf32>
    %172 = vector.extract_strided_slice %157 {offsets = [0, 96], sizes = [2, 32], strides = [1, 1]} : vector<2x128xf32> to vector<2x32xf32>
    %173 = arith.negf %172 : vector<2x32xf32>
    %174 = math.exp %173 : vector<2x32xf32>
    %cst_51 = arith.constant 1.000000e+00 : f32
    %175 = vector.broadcast %cst_51 : f32 to vector<2x32xf32>
    %176 = arith.addf %175, %174 : vector<2x32xf32>
    %177 = arith.divf %175, %176 : vector<2x32xf32>
    %178 = arith.mulf %169, %151 : vector<2x32xf32>
    %179 = arith.mulf %163, %171 : vector<2x32xf32>
    %180 = arith.addf %178, %179 : vector<2x32xf32>
    %181 = math.tanh %180 : vector<2x32xf32>
    %182 = arith.mulf %177, %181 : vector<2x32xf32>
    %c10_52 = arith.constant 10 : index
    %c0_53 = arith.constant 0 : index
    %183 = vector.load %arg10[%c10_52, %c0_53] : memref<16x32xf32, #tpu.memory_space<vmem>>, vector<2x32xf32>
    tpu.vector_store %arg10[%c10_52, %c0_53], %182 {strides = array<i32>} : memref<16x32xf32, #tpu.memory_space<vmem>>, vector<2x32xf32>,
    %c12 = arith.constant 12 : index
    %c0_54 = arith.constant 0 : index
    %184 = vector.load %arg11[%c12, %c0_54] : memref<16x128xf32, #tpu.memory_space<vmem>>, vector<2x128xf32>
    %cst_55 = arith.constant dense<0.000000e+00> : vector<2x128xf32>
    %185 = tpu.matmul %182, %7, %cst_55 {dimension_numbers = #tpu.dot_dimension_numbers<[1], [0], [0], [1], [0, 0, 1, 1], [], []>} : vector<2x32xf32>, vector<32x128xf32>, vector<2x128xf32> -> vector<2x128xf32>
    %186 = arith.addf %184, %185 : vector<2x128xf32>
    %187 = vector.extract_strided_slice %186 {offsets = [0, 0], sizes = [2, 32], strides = [1, 1]} : vector<2x128xf32> to vector<2x32xf32>
    %188 = arith.negf %187 : vector<2x32xf32>
    %189 = math.exp %188 : vector<2x32xf32>
    %cst_56 = arith.constant 1.000000e+00 : f32
    %190 = vector.broadcast %cst_56 : f32 to vector<2x32xf32>
    %191 = arith.addf %190, %189 : vector<2x32xf32>
    %192 = arith.divf %190, %191 : vector<2x32xf32>
    %193 = vector.extract_strided_slice %186 {offsets = [0, 32], sizes = [2, 32], strides = [1, 1]} : vector<2x128xf32> to vector<2x32xf32>
    %194 = arith.negf %193 : vector<2x32xf32>
    %195 = math.exp %194 : vector<2x32xf32>
    %cst_57 = arith.constant 1.000000e+00 : f32
    %196 = vector.broadcast %cst_57 : f32 to vector<2x32xf32>
    %197 = arith.addf %196, %195 : vector<2x32xf32>
    %198 = arith.divf %196, %197 : vector<2x32xf32>
    %199 = vector.extract_strided_slice %186 {offsets = [0, 64], sizes = [2, 32], strides = [1, 1]} : vector<2x128xf32> to vector<2x32xf32>
    %200 = math.tanh %199 : vector<2x32xf32>
    %201 = vector.extract_strided_slice %186 {offsets = [0, 96], sizes = [2, 32], strides = [1, 1]} : vector<2x128xf32> to vector<2x32xf32>
    %202 = arith.negf %201 : vector<2x32xf32>
    %203 = math.exp %202 : vector<2x32xf32>
    %cst_58 = arith.constant 1.000000e+00 : f32
    %204 = vector.broadcast %cst_58 : f32 to vector<2x32xf32>
    %205 = arith.addf %204, %203 : vector<2x32xf32>
    %206 = arith.divf %204, %205 : vector<2x32xf32>
    %207 = arith.mulf %198, %180 : vector<2x32xf32>
    %208 = arith.mulf %192, %200 : vector<2x32xf32>
    %209 = arith.addf %207, %208 : vector<2x32xf32>
    %210 = math.tanh %209 : vector<2x32xf32>
    %211 = arith.mulf %206, %210 : vector<2x32xf32>
    %c12_59 = arith.constant 12 : index
    %c0_60 = arith.constant 0 : index
    %212 = vector.load %arg10[%c12_59, %c0_60] : memref<16x32xf32, #tpu.memory_space<vmem>>, vector<2x32xf32>
    tpu.vector_store %arg10[%c12_59, %c0_60], %211 {strides = array<i32>} : memref<16x32xf32, #tpu.memory_space<vmem>>, vector<2x32xf32>,
    %c14 = arith.constant 14 : index
    %c0_61 = arith.constant 0 : index
    %213 = vector.load %arg11[%c14, %c0_61] : memref<16x128xf32, #tpu.memory_space<vmem>>, vector<2x128xf32>
    %cst_62 = arith.constant dense<0.000000e+00> : vector<2x128xf32>
    %214 = tpu.matmul %211, %7, %cst_62 {dimension_numbers = #tpu.dot_dimension_numbers<[1], [0], [0], [1], [0, 0, 1, 1], [], []>} : vector<2x32xf32>, vector<32x128xf32>, vector<2x128xf32> -> vector<2x128xf32>
    %215 = arith.addf %213, %214 : vector<2x128xf32>
    %216 = vector.extract_strided_slice %215 {offsets = [0, 0], sizes = [2, 32], strides = [1, 1]} : vector<2x128xf32> to vector<2x32xf32>
    %217 = arith.negf %216 : vector<2x32xf32>
    %218 = math.exp %217 : vector<2x32xf32>
    %cst_63 = arith.constant 1.000000e+00 : f32
    %219 = vector.broadcast %cst_63 : f32 to vector<2x32xf32>
    %220 = arith.addf %219, %218 : vector<2x32xf32>
    %221 = arith.divf %219, %220 : vector<2x32xf32>
    %222 = vector.extract_strided_slice %215 {offsets = [0, 32], sizes = [2, 32], strides = [1, 1]} : vector<2x128xf32> to vector<2x32xf32>
    %223 = arith.negf %222 : vector<2x32xf32>
    %224 = math.exp %223 : vector<2x32xf32>
    %cst_64 = arith.constant 1.000000e+00 : f32
    %225 = vector.broadcast %cst_64 : f32 to vector<2x32xf32>
    %226 = arith.addf %225, %224 : vector<2x32xf32>
    %227 = arith.divf %225, %226 : vector<2x32xf32>
    %228 = vector.extract_strided_slice %215 {offsets = [0, 64], sizes = [2, 32], strides = [1, 1]} : vector<2x128xf32> to vector<2x32xf32>
    %229 = math.tanh %228 : vector<2x32xf32>
    %230 = vector.extract_strided_slice %215 {offsets = [0, 96], sizes = [2, 32], strides = [1, 1]} : vector<2x128xf32> to vector<2x32xf32>
    %231 = arith.negf %230 : vector<2x32xf32>
    %232 = math.exp %231 : vector<2x32xf32>
    %cst_65 = arith.constant 1.000000e+00 : f32
    %233 = vector.broadcast %cst_65 : f32 to vector<2x32xf32>
    %234 = arith.addf %233, %232 : vector<2x32xf32>
    %235 = arith.divf %233, %234 : vector<2x32xf32>
    %236 = arith.mulf %227, %209 : vector<2x32xf32>
    %237 = arith.mulf %221, %229 : vector<2x32xf32>
    %238 = arith.addf %236, %237 : vector<2x32xf32>
    %239 = math.tanh %238 : vector<2x32xf32>
    %240 = arith.mulf %235, %239 : vector<2x32xf32>
    %c14_66 = arith.constant 14 : index
    %c0_67 = arith.constant 0 : index
    %241 = vector.load %arg10[%c14_66, %c0_67] : memref<16x32xf32, #tpu.memory_space<vmem>>, vector<2x32xf32>
    tpu.vector_store %arg10[%c14_66, %c0_67], %240 {strides = array<i32>} : memref<16x32xf32, #tpu.memory_space<vmem>>, vector<2x32xf32>,
    %c0_68 = arith.constant 0 : index
    %c0_69 = arith.constant 0 : index
    %242 = vector.load %arg10[%c0_68, %c0_69] : memref<16x32xf32, #tpu.memory_space<vmem>>, vector<16x32xf32>
    %c0_70 = arith.constant 0 : index
    %c0_71 = arith.constant 0 : index
    %243 = vector.load %arg4[%c0_70, %c0_71] : memref<32x128xf32, #tpu.memory_space<vmem>>, vector<32x128xf32>
    %cst_72 = arith.constant dense<0.000000e+00> : vector<16x128xf32>
    %244 = tpu.matmul %242, %243, %cst_72 {dimension_numbers = #tpu.dot_dimension_numbers<[1], [0], [0], [1], [0, 0, 1, 1], [], []>} : vector<16x32xf32>, vector<32x128xf32>, vector<16x128xf32> -> vector<16x128xf32>
    %c0_73 = arith.constant 0 : index
    %c0_74 = arith.constant 0 : index
    %245 = vector.load %arg6[%c0_73, %c0_74] : memref<1x128xf32, #tpu.memory_space<vmem>>, vector<1x128xf32>
    %246 = vector.broadcast %245 : vector<1x128xf32> to vector<16x128xf32>
    %247 = arith.addf %244, %246 : vector<16x128xf32>
    %c0_75 = arith.constant 0 : index
    %c0_76 = arith.constant 0 : index
    %248 = vector.load %arg11[%c0_75, %c0_76] : memref<16x128xf32, #tpu.memory_space<vmem>>, vector<16x128xf32>
    tpu.vector_store %arg11[%c0_75, %c0_76], %247 {strides = array<i32>} : memref<16x128xf32, #tpu.memory_space<vmem>>, vector<16x128xf32>,
    %c0_77 = arith.constant 0 : index
    %c0_78 = arith.constant 0 : index
    %249 = vector.load %arg5[%c0_77, %c0_78] : memref<32x128xf32, #tpu.memory_space<vmem>>, vector<32x128xf32>
    %cst_79 = arith.constant 0.000000e+00 : f32
    %250 = vector.broadcast %cst_79 : f32 to vector<2x32xf32>
    %cst_80 = arith.constant 0.000000e+00 : f32
    %251 = vector.broadcast %cst_80 : f32 to vector<2x32xf32>
    %c0_81 = arith.constant 0 : index
    %c0_82 = arith.constant 0 : index
    %252 = vector.load %arg11[%c0_81, %c0_82] : memref<16x128xf32, #tpu.memory_space<vmem>>, vector<2x128xf32>
    %cst_83 = arith.constant dense<0.000000e+00> : vector<2x128xf32>
    %253 = tpu.matmul %250, %249, %cst_83 {dimension_numbers = #tpu.dot_dimension_numbers<[1], [0], [0], [1], [0, 0, 1, 1], [], []>} : vector<2x32xf32>, vector<32x128xf32>, vector<2x128xf32> -> vector<2x128xf32>
    %254 = arith.addf %252, %253 : vector<2x128xf32>
    %255 = vector.extract_strided_slice %254 {offsets = [0, 0], sizes = [2, 32], strides = [1, 1]} : vector<2x128xf32> to vector<2x32xf32>
    %256 = arith.negf %255 : vector<2x32xf32>
    %257 = math.exp %256 : vector<2x32xf32>
    %cst_84 = arith.constant 1.000000e+00 : f32
    %258 = vector.broadcast %cst_84 : f32 to vector<2x32xf32>
    %259 = arith.addf %258, %257 : vector<2x32xf32>
    %260 = arith.divf %258, %259 : vector<2x32xf32>
    %261 = vector.extract_strided_slice %254 {offsets = [0, 32], sizes = [2, 32], strides = [1, 1]} : vector<2x128xf32> to vector<2x32xf32>
    %262 = arith.negf %261 : vector<2x32xf32>
    %263 = math.exp %262 : vector<2x32xf32>
    %cst_85 = arith.constant 1.000000e+00 : f32
    %264 = vector.broadcast %cst_85 : f32 to vector<2x32xf32>
    %265 = arith.addf %264, %263 : vector<2x32xf32>
    %266 = arith.divf %264, %265 : vector<2x32xf32>
    %267 = vector.extract_strided_slice %254 {offsets = [0, 64], sizes = [2, 32], strides = [1, 1]} : vector<2x128xf32> to vector<2x32xf32>
    %268 = math.tanh %267 : vector<2x32xf32>
    %269 = vector.extract_strided_slice %254 {offsets = [0, 96], sizes = [2, 32], strides = [1, 1]} : vector<2x128xf32> to vector<2x32xf32>
    %270 = arith.negf %269 : vector<2x32xf32>
    %271 = math.exp %270 : vector<2x32xf32>
    %cst_86 = arith.constant 1.000000e+00 : f32
    %272 = vector.broadcast %cst_86 : f32 to vector<2x32xf32>
    %273 = arith.addf %272, %271 : vector<2x32xf32>
    %274 = arith.divf %272, %273 : vector<2x32xf32>
    %275 = arith.mulf %266, %251 : vector<2x32xf32>
    %276 = arith.mulf %260, %268 : vector<2x32xf32>
    %277 = arith.addf %275, %276 : vector<2x32xf32>
    %278 = math.tanh %277 : vector<2x32xf32>
    %279 = arith.mulf %274, %278 : vector<2x32xf32>
    %c0_87 = arith.constant 0 : index
    %c0_88 = arith.constant 0 : index
    %280 = vector.load %arg10[%c0_87, %c0_88] : memref<16x32xf32, #tpu.memory_space<vmem>>, vector<2x32xf32>
    tpu.vector_store %arg10[%c0_87, %c0_88], %279 {strides = array<i32>} : memref<16x32xf32, #tpu.memory_space<vmem>>, vector<2x32xf32>,
    %c2_89 = arith.constant 2 : index
    %c0_90 = arith.constant 0 : index
    %281 = vector.load %arg11[%c2_89, %c0_90] : memref<16x128xf32, #tpu.memory_space<vmem>>, vector<2x128xf32>
    %cst_91 = arith.constant dense<0.000000e+00> : vector<2x128xf32>
    %282 = tpu.matmul %279, %249, %cst_91 {dimension_numbers = #tpu.dot_dimension_numbers<[1], [0], [0], [1], [0, 0, 1, 1], [], []>} : vector<2x32xf32>, vector<32x128xf32>, vector<2x128xf32> -> vector<2x128xf32>
    %283 = arith.addf %281, %282 : vector<2x128xf32>
    %284 = vector.extract_strided_slice %283 {offsets = [0, 0], sizes = [2, 32], strides = [1, 1]} : vector<2x128xf32> to vector<2x32xf32>
    %285 = arith.negf %284 : vector<2x32xf32>
    %286 = math.exp %285 : vector<2x32xf32>
    %cst_92 = arith.constant 1.000000e+00 : f32
    %287 = vector.broadcast %cst_92 : f32 to vector<2x32xf32>
    %288 = arith.addf %287, %286 : vector<2x32xf32>
    %289 = arith.divf %287, %288 : vector<2x32xf32>
    %290 = vector.extract_strided_slice %283 {offsets = [0, 32], sizes = [2, 32], strides = [1, 1]} : vector<2x128xf32> to vector<2x32xf32>
    %291 = arith.negf %290 : vector<2x32xf32>
    %292 = math.exp %291 : vector<2x32xf32>
    %cst_93 = arith.constant 1.000000e+00 : f32
    %293 = vector.broadcast %cst_93 : f32 to vector<2x32xf32>
    %294 = arith.addf %293, %292 : vector<2x32xf32>
    %295 = arith.divf %293, %294 : vector<2x32xf32>
    %296 = vector.extract_strided_slice %283 {offsets = [0, 64], sizes = [2, 32], strides = [1, 1]} : vector<2x128xf32> to vector<2x32xf32>
    %297 = math.tanh %296 : vector<2x32xf32>
    %298 = vector.extract_strided_slice %283 {offsets = [0, 96], sizes = [2, 32], strides = [1, 1]} : vector<2x128xf32> to vector<2x32xf32>
    %299 = arith.negf %298 : vector<2x32xf32>
    %300 = math.exp %299 : vector<2x32xf32>
    %cst_94 = arith.constant 1.000000e+00 : f32
    %301 = vector.broadcast %cst_94 : f32 to vector<2x32xf32>
    %302 = arith.addf %301, %300 : vector<2x32xf32>
    %303 = arith.divf %301, %302 : vector<2x32xf32>
    %304 = arith.mulf %295, %277 : vector<2x32xf32>
    %305 = arith.mulf %289, %297 : vector<2x32xf32>
    %306 = arith.addf %304, %305 : vector<2x32xf32>
    %307 = math.tanh %306 : vector<2x32xf32>
    %308 = arith.mulf %303, %307 : vector<2x32xf32>
    %c2_95 = arith.constant 2 : index
    %c0_96 = arith.constant 0 : index
    %309 = vector.load %arg10[%c2_95, %c0_96] : memref<16x32xf32, #tpu.memory_space<vmem>>, vector<2x32xf32>
    tpu.vector_store %arg10[%c2_95, %c0_96], %308 {strides = array<i32>} : memref<16x32xf32, #tpu.memory_space<vmem>>, vector<2x32xf32>,
    %c4_97 = arith.constant 4 : index
    %c0_98 = arith.constant 0 : index
    %310 = vector.load %arg11[%c4_97, %c0_98] : memref<16x128xf32, #tpu.memory_space<vmem>>, vector<2x128xf32>
    %cst_99 = arith.constant dense<0.000000e+00> : vector<2x128xf32>
    %311 = tpu.matmul %308, %249, %cst_99 {dimension_numbers = #tpu.dot_dimension_numbers<[1], [0], [0], [1], [0, 0, 1, 1], [], []>} : vector<2x32xf32>, vector<32x128xf32>, vector<2x128xf32> -> vector<2x128xf32>
    %312 = arith.addf %310, %311 : vector<2x128xf32>
    %313 = vector.extract_strided_slice %312 {offsets = [0, 0], sizes = [2, 32], strides = [1, 1]} : vector<2x128xf32> to vector<2x32xf32>
    %314 = arith.negf %313 : vector<2x32xf32>
    %315 = math.exp %314 : vector<2x32xf32>
    %cst_100 = arith.constant 1.000000e+00 : f32
    %316 = vector.broadcast %cst_100 : f32 to vector<2x32xf32>
    %317 = arith.addf %316, %315 : vector<2x32xf32>
    %318 = arith.divf %316, %317 : vector<2x32xf32>
    %319 = vector.extract_strided_slice %312 {offsets = [0, 32], sizes = [2, 32], strides = [1, 1]} : vector<2x128xf32> to vector<2x32xf32>
    %320 = arith.negf %319 : vector<2x32xf32>
    %321 = math.exp %320 : vector<2x32xf32>
    %cst_101 = arith.constant 1.000000e+00 : f32
    %322 = vector.broadcast %cst_101 : f32 to vector<2x32xf32>
    %323 = arith.addf %322, %321 : vector<2x32xf32>
    %324 = arith.divf %322, %323 : vector<2x32xf32>
    %325 = vector.extract_strided_slice %312 {offsets = [0, 64], sizes = [2, 32], strides = [1, 1]} : vector<2x128xf32> to vector<2x32xf32>
    %326 = math.tanh %325 : vector<2x32xf32>
    %327 = vector.extract_strided_slice %312 {offsets = [0, 96], sizes = [2, 32], strides = [1, 1]} : vector<2x128xf32> to vector<2x32xf32>
    %328 = arith.negf %327 : vector<2x32xf32>
    %329 = math.exp %328 : vector<2x32xf32>
    %cst_102 = arith.constant 1.000000e+00 : f32
    %330 = vector.broadcast %cst_102 : f32 to vector<2x32xf32>
    %331 = arith.addf %330, %329 : vector<2x32xf32>
    %332 = arith.divf %330, %331 : vector<2x32xf32>
    %333 = arith.mulf %324, %306 : vector<2x32xf32>
    %334 = arith.mulf %318, %326 : vector<2x32xf32>
    %335 = arith.addf %333, %334 : vector<2x32xf32>
    %336 = math.tanh %335 : vector<2x32xf32>
    %337 = arith.mulf %332, %336 : vector<2x32xf32>
    %c4_103 = arith.constant 4 : index
    %c0_104 = arith.constant 0 : index
    %338 = vector.load %arg10[%c4_103, %c0_104] : memref<16x32xf32, #tpu.memory_space<vmem>>, vector<2x32xf32>
    tpu.vector_store %arg10[%c4_103, %c0_104], %337 {strides = array<i32>} : memref<16x32xf32, #tpu.memory_space<vmem>>, vector<2x32xf32>,
    %c6_105 = arith.constant 6 : index
    %c0_106 = arith.constant 0 : index
    %339 = vector.load %arg11[%c6_105, %c0_106] : memref<16x128xf32, #tpu.memory_space<vmem>>, vector<2x128xf32>
    %cst_107 = arith.constant dense<0.000000e+00> : vector<2x128xf32>
    %340 = tpu.matmul %337, %249, %cst_107 {dimension_numbers = #tpu.dot_dimension_numbers<[1], [0], [0], [1], [0, 0, 1, 1], [], []>} : vector<2x32xf32>, vector<32x128xf32>, vector<2x128xf32> -> vector<2x128xf32>
    %341 = arith.addf %339, %340 : vector<2x128xf32>
    %342 = vector.extract_strided_slice %341 {offsets = [0, 0], sizes = [2, 32], strides = [1, 1]} : vector<2x128xf32> to vector<2x32xf32>
    %343 = arith.negf %342 : vector<2x32xf32>
    %344 = math.exp %343 : vector<2x32xf32>
    %cst_108 = arith.constant 1.000000e+00 : f32
    %345 = vector.broadcast %cst_108 : f32 to vector<2x32xf32>
    %346 = arith.addf %345, %344 : vector<2x32xf32>
    %347 = arith.divf %345, %346 : vector<2x32xf32>
    %348 = vector.extract_strided_slice %341 {offsets = [0, 32], sizes = [2, 32], strides = [1, 1]} : vector<2x128xf32> to vector<2x32xf32>
    %349 = arith.negf %348 : vector<2x32xf32>
    %350 = math.exp %349 : vector<2x32xf32>
    %cst_109 = arith.constant 1.000000e+00 : f32
    %351 = vector.broadcast %cst_109 : f32 to vector<2x32xf32>
    %352 = arith.addf %351, %350 : vector<2x32xf32>
    %353 = arith.divf %351, %352 : vector<2x32xf32>
    %354 = vector.extract_strided_slice %341 {offsets = [0, 64], sizes = [2, 32], strides = [1, 1]} : vector<2x128xf32> to vector<2x32xf32>
    %355 = math.tanh %354 : vector<2x32xf32>
    %356 = vector.extract_strided_slice %341 {offsets = [0, 96], sizes = [2, 32], strides = [1, 1]} : vector<2x128xf32> to vector<2x32xf32>
    %357 = arith.negf %356 : vector<2x32xf32>
    %358 = math.exp %357 : vector<2x32xf32>
    %cst_110 = arith.constant 1.000000e+00 : f32
    %359 = vector.broadcast %cst_110 : f32 to vector<2x32xf32>
    %360 = arith.addf %359, %358 : vector<2x32xf32>
    %361 = arith.divf %359, %360 : vector<2x32xf32>
    %362 = arith.mulf %353, %335 : vector<2x32xf32>
    %363 = arith.mulf %347, %355 : vector<2x32xf32>
    %364 = arith.addf %362, %363 : vector<2x32xf32>
    %365 = math.tanh %364 : vector<2x32xf32>
    %366 = arith.mulf %361, %365 : vector<2x32xf32>
    %c6_111 = arith.constant 6 : index
    %c0_112 = arith.constant 0 : index
    %367 = vector.load %arg10[%c6_111, %c0_112] : memref<16x32xf32, #tpu.memory_space<vmem>>, vector<2x32xf32>
    tpu.vector_store %arg10[%c6_111, %c0_112], %366 {strides = array<i32>} : memref<16x32xf32, #tpu.memory_space<vmem>>, vector<2x32xf32>,
    %c8_113 = arith.constant 8 : index
    %c0_114 = arith.constant 0 : index
    %368 = vector.load %arg11[%c8_113, %c0_114] : memref<16x128xf32, #tpu.memory_space<vmem>>, vector<2x128xf32>
    %cst_115 = arith.constant dense<0.000000e+00> : vector<2x128xf32>
    %369 = tpu.matmul %366, %249, %cst_115 {dimension_numbers = #tpu.dot_dimension_numbers<[1], [0], [0], [1], [0, 0, 1, 1], [], []>} : vector<2x32xf32>, vector<32x128xf32>, vector<2x128xf32> -> vector<2x128xf32>
    %370 = arith.addf %368, %369 : vector<2x128xf32>
    %371 = vector.extract_strided_slice %370 {offsets = [0, 0], sizes = [2, 32], strides = [1, 1]} : vector<2x128xf32> to vector<2x32xf32>
    %372 = arith.negf %371 : vector<2x32xf32>
    %373 = math.exp %372 : vector<2x32xf32>
    %cst_116 = arith.constant 1.000000e+00 : f32
    %374 = vector.broadcast %cst_116 : f32 to vector<2x32xf32>
    %375 = arith.addf %374, %373 : vector<2x32xf32>
    %376 = arith.divf %374, %375 : vector<2x32xf32>
    %377 = vector.extract_strided_slice %370 {offsets = [0, 32], sizes = [2, 32], strides = [1, 1]} : vector<2x128xf32> to vector<2x32xf32>
    %378 = arith.negf %377 : vector<2x32xf32>
    %379 = math.exp %378 : vector<2x32xf32>
    %cst_117 = arith.constant 1.000000e+00 : f32
    %380 = vector.broadcast %cst_117 : f32 to vector<2x32xf32>
    %381 = arith.addf %380, %379 : vector<2x32xf32>
    %382 = arith.divf %380, %381 : vector<2x32xf32>
    %383 = vector.extract_strided_slice %370 {offsets = [0, 64], sizes = [2, 32], strides = [1, 1]} : vector<2x128xf32> to vector<2x32xf32>
    %384 = math.tanh %383 : vector<2x32xf32>
    %385 = vector.extract_strided_slice %370 {offsets = [0, 96], sizes = [2, 32], strides = [1, 1]} : vector<2x128xf32> to vector<2x32xf32>
    %386 = arith.negf %385 : vector<2x32xf32>
    %387 = math.exp %386 : vector<2x32xf32>
    %cst_118 = arith.constant 1.000000e+00 : f32
    %388 = vector.broadcast %cst_118 : f32 to vector<2x32xf32>
    %389 = arith.addf %388, %387 : vector<2x32xf32>
    %390 = arith.divf %388, %389 : vector<2x32xf32>
    %391 = arith.mulf %382, %364 : vector<2x32xf32>
    %392 = arith.mulf %376, %384 : vector<2x32xf32>
    %393 = arith.addf %391, %392 : vector<2x32xf32>
    %394 = math.tanh %393 : vector<2x32xf32>
    %395 = arith.mulf %390, %394 : vector<2x32xf32>
    %c8_119 = arith.constant 8 : index
    %c0_120 = arith.constant 0 : index
    %396 = vector.load %arg10[%c8_119, %c0_120] : memref<16x32xf32, #tpu.memory_space<vmem>>, vector<2x32xf32>
    tpu.vector_store %arg10[%c8_119, %c0_120], %395 {strides = array<i32>} : memref<16x32xf32, #tpu.memory_space<vmem>>, vector<2x32xf32>,
    %c10_121 = arith.constant 10 : index
    %c0_122 = arith.constant 0 : index
    %397 = vector.load %arg11[%c10_121, %c0_122] : memref<16x128xf32, #tpu.memory_space<vmem>>, vector<2x128xf32>
    %cst_123 = arith.constant dense<0.000000e+00> : vector<2x128xf32>
    %398 = tpu.matmul %395, %249, %cst_123 {dimension_numbers = #tpu.dot_dimension_numbers<[1], [0], [0], [1], [0, 0, 1, 1], [], []>} : vector<2x32xf32>, vector<32x128xf32>, vector<2x128xf32> -> vector<2x128xf32>
    %399 = arith.addf %397, %398 : vector<2x128xf32>
    %400 = vector.extract_strided_slice %399 {offsets = [0, 0], sizes = [2, 32], strides = [1, 1]} : vector<2x128xf32> to vector<2x32xf32>
    %401 = arith.negf %400 : vector<2x32xf32>
    %402 = math.exp %401 : vector<2x32xf32>
    %cst_124 = arith.constant 1.000000e+00 : f32
    %403 = vector.broadcast %cst_124 : f32 to vector<2x32xf32>
    %404 = arith.addf %403, %402 : vector<2x32xf32>
    %405 = arith.divf %403, %404 : vector<2x32xf32>
    %406 = vector.extract_strided_slice %399 {offsets = [0, 32], sizes = [2, 32], strides = [1, 1]} : vector<2x128xf32> to vector<2x32xf32>
    %407 = arith.negf %406 : vector<2x32xf32>
    %408 = math.exp %407 : vector<2x32xf32>
    %cst_125 = arith.constant 1.000000e+00 : f32
    %409 = vector.broadcast %cst_125 : f32 to vector<2x32xf32>
    %410 = arith.addf %409, %408 : vector<2x32xf32>
    %411 = arith.divf %409, %410 : vector<2x32xf32>
    %412 = vector.extract_strided_slice %399 {offsets = [0, 64], sizes = [2, 32], strides = [1, 1]} : vector<2x128xf32> to vector<2x32xf32>
    %413 = math.tanh %412 : vector<2x32xf32>
    %414 = vector.extract_strided_slice %399 {offsets = [0, 96], sizes = [2, 32], strides = [1, 1]} : vector<2x128xf32> to vector<2x32xf32>
    %415 = arith.negf %414 : vector<2x32xf32>
    %416 = math.exp %415 : vector<2x32xf32>
    %cst_126 = arith.constant 1.000000e+00 : f32
    %417 = vector.broadcast %cst_126 : f32 to vector<2x32xf32>
    %418 = arith.addf %417, %416 : vector<2x32xf32>
    %419 = arith.divf %417, %418 : vector<2x32xf32>
    %420 = arith.mulf %411, %393 : vector<2x32xf32>
    %421 = arith.mulf %405, %413 : vector<2x32xf32>
    %422 = arith.addf %420, %421 : vector<2x32xf32>
    %423 = math.tanh %422 : vector<2x32xf32>
    %424 = arith.mulf %419, %423 : vector<2x32xf32>
    %c10_127 = arith.constant 10 : index
    %c0_128 = arith.constant 0 : index
    %425 = vector.load %arg10[%c10_127, %c0_128] : memref<16x32xf32, #tpu.memory_space<vmem>>, vector<2x32xf32>
    tpu.vector_store %arg10[%c10_127, %c0_128], %424 {strides = array<i32>} : memref<16x32xf32, #tpu.memory_space<vmem>>, vector<2x32xf32>,
    %c12_129 = arith.constant 12 : index
    %c0_130 = arith.constant 0 : index
    %426 = vector.load %arg11[%c12_129, %c0_130] : memref<16x128xf32, #tpu.memory_space<vmem>>, vector<2x128xf32>
    %cst_131 = arith.constant dense<0.000000e+00> : vector<2x128xf32>
    %427 = tpu.matmul %424, %249, %cst_131 {dimension_numbers = #tpu.dot_dimension_numbers<[1], [0], [0], [1], [0, 0, 1, 1], [], []>} : vector<2x32xf32>, vector<32x128xf32>, vector<2x128xf32> -> vector<2x128xf32>
    %428 = arith.addf %426, %427 : vector<2x128xf32>
    %429 = vector.extract_strided_slice %428 {offsets = [0, 0], sizes = [2, 32], strides = [1, 1]} : vector<2x128xf32> to vector<2x32xf32>
    %430 = arith.negf %429 : vector<2x32xf32>
    %431 = math.exp %430 : vector<2x32xf32>
    %cst_132 = arith.constant 1.000000e+00 : f32
    %432 = vector.broadcast %cst_132 : f32 to vector<2x32xf32>
    %433 = arith.addf %432, %431 : vector<2x32xf32>
    %434 = arith.divf %432, %433 : vector<2x32xf32>
    %435 = vector.extract_strided_slice %428 {offsets = [0, 32], sizes = [2, 32], strides = [1, 1]} : vector<2x128xf32> to vector<2x32xf32>
    %436 = arith.negf %435 : vector<2x32xf32>
    %437 = math.exp %436 : vector<2x32xf32>
    %cst_133 = arith.constant 1.000000e+00 : f32
    %438 = vector.broadcast %cst_133 : f32 to vector<2x32xf32>
    %439 = arith.addf %438, %437 : vector<2x32xf32>
    %440 = arith.divf %438, %439 : vector<2x32xf32>
    %441 = vector.extract_strided_slice %428 {offsets = [0, 64], sizes = [2, 32], strides = [1, 1]} : vector<2x128xf32> to vector<2x32xf32>
    %442 = math.tanh %441 : vector<2x32xf32>
    %443 = vector.extract_strided_slice %428 {offsets = [0, 96], sizes = [2, 32], strides = [1, 1]} : vector<2x128xf32> to vector<2x32xf32>
    %444 = arith.negf %443 : vector<2x32xf32>
    %445 = math.exp %444 : vector<2x32xf32>
    %cst_134 = arith.constant 1.000000e+00 : f32
    %446 = vector.broadcast %cst_134 : f32 to vector<2x32xf32>
    %447 = arith.addf %446, %445 : vector<2x32xf32>
    %448 = arith.divf %446, %447 : vector<2x32xf32>
    %449 = arith.mulf %440, %422 : vector<2x32xf32>
    %450 = arith.mulf %434, %442 : vector<2x32xf32>
    %451 = arith.addf %449, %450 : vector<2x32xf32>
    %452 = math.tanh %451 : vector<2x32xf32>
    %453 = arith.mulf %448, %452 : vector<2x32xf32>
    %c12_135 = arith.constant 12 : index
    %c0_136 = arith.constant 0 : index
    %454 = vector.load %arg10[%c12_135, %c0_136] : memref<16x32xf32, #tpu.memory_space<vmem>>, vector<2x32xf32>
    tpu.vector_store %arg10[%c12_135, %c0_136], %453 {strides = array<i32>} : memref<16x32xf32, #tpu.memory_space<vmem>>, vector<2x32xf32>,
    %c14_137 = arith.constant 14 : index
    %c0_138 = arith.constant 0 : index
    %455 = vector.load %arg11[%c14_137, %c0_138] : memref<16x128xf32, #tpu.memory_space<vmem>>, vector<2x128xf32>
    %cst_139 = arith.constant dense<0.000000e+00> : vector<2x128xf32>
    %456 = tpu.matmul %453, %249, %cst_139 {dimension_numbers = #tpu.dot_dimension_numbers<[1], [0], [0], [1], [0, 0, 1, 1], [], []>} : vector<2x32xf32>, vector<32x128xf32>, vector<2x128xf32> -> vector<2x128xf32>
    %457 = arith.addf %455, %456 : vector<2x128xf32>
    %458 = vector.extract_strided_slice %457 {offsets = [0, 0], sizes = [2, 32], strides = [1, 1]} : vector<2x128xf32> to vector<2x32xf32>
    %459 = arith.negf %458 : vector<2x32xf32>
    %460 = math.exp %459 : vector<2x32xf32>
    %cst_140 = arith.constant 1.000000e+00 : f32
    %461 = vector.broadcast %cst_140 : f32 to vector<2x32xf32>
    %462 = arith.addf %461, %460 : vector<2x32xf32>
    %463 = arith.divf %461, %462 : vector<2x32xf32>
    %464 = vector.extract_strided_slice %457 {offsets = [0, 32], sizes = [2, 32], strides = [1, 1]} : vector<2x128xf32> to vector<2x32xf32>
    %465 = arith.negf %464 : vector<2x32xf32>
    %466 = math.exp %465 : vector<2x32xf32>
    %cst_141 = arith.constant 1.000000e+00 : f32
    %467 = vector.broadcast %cst_141 : f32 to vector<2x32xf32>
    %468 = arith.addf %467, %466 : vector<2x32xf32>
    %469 = arith.divf %467, %468 : vector<2x32xf32>
    %470 = vector.extract_strided_slice %457 {offsets = [0, 64], sizes = [2, 32], strides = [1, 1]} : vector<2x128xf32> to vector<2x32xf32>
    %471 = math.tanh %470 : vector<2x32xf32>
    %472 = vector.extract_strided_slice %457 {offsets = [0, 96], sizes = [2, 32], strides = [1, 1]} : vector<2x128xf32> to vector<2x32xf32>
    %473 = arith.negf %472 : vector<2x32xf32>
    %474 = math.exp %473 : vector<2x32xf32>
    %cst_142 = arith.constant 1.000000e+00 : f32
    %475 = vector.broadcast %cst_142 : f32 to vector<2x32xf32>
    %476 = arith.addf %475, %474 : vector<2x32xf32>
    %477 = arith.divf %475, %476 : vector<2x32xf32>
    %478 = arith.mulf %469, %451 : vector<2x32xf32>
    %479 = arith.mulf %463, %471 : vector<2x32xf32>
    %480 = arith.addf %478, %479 : vector<2x32xf32>
    %481 = math.tanh %480 : vector<2x32xf32>
    %482 = arith.mulf %477, %481 : vector<2x32xf32>
    %c14_143 = arith.constant 14 : index
    %c0_144 = arith.constant 0 : index
    %483 = vector.load %arg10[%c14_143, %c0_144] : memref<16x32xf32, #tpu.memory_space<vmem>>, vector<2x32xf32>
    tpu.vector_store %arg10[%c14_143, %c0_144], %482 {strides = array<i32>} : memref<16x32xf32, #tpu.memory_space<vmem>>, vector<2x32xf32>,
    %c0_145 = arith.constant 0 : index
    %c0_146 = arith.constant 0 : index
    %484 = vector.load %arg10[%c0_145, %c0_146] : memref<16x32xf32, #tpu.memory_space<vmem>>, vector<16x32xf32>
    %c0_147 = arith.constant 0 : index
    %c0_148 = arith.constant 0 : index
    %485 = vector.load %arg7[%c0_147, %c0_148] : memref<32x4xf32, #tpu.memory_space<vmem>>, vector<32x4xf32>
    %cst_149 = arith.constant dense<0.000000e+00> : vector<16x4xf32>
    %486 = tpu.matmul %484, %485, %cst_149 {dimension_numbers = #tpu.dot_dimension_numbers<[1], [0], [0], [1], [0, 0, 1, 1], [], []>} : vector<16x32xf32>, vector<32x4xf32>, vector<16x4xf32> -> vector<16x4xf32>
    %c0_150 = arith.constant 0 : index
    %c0_151 = arith.constant 0 : index
    %487 = vector.load %arg8[%c0_150, %c0_151] : memref<1x4xf32, #tpu.memory_space<vmem>>, vector<1x4xf32>
    %488 = vector.broadcast %487 : vector<1x4xf32> to vector<16x4xf32>
    %489 = arith.addf %486, %488 : vector<16x4xf32>
    %c0_152 = arith.constant 0 : index
    %c0_153 = arith.constant 0 : index
    %490 = vector.load %arg9[%c0_152, %c0_153] : memref<16x4xf32, #tpu.memory_space<vmem>>, vector<16x4xf32>
    tpu.vector_store %arg9[%c0_152, %c0_153], %489 {strides = array<i32>} : memref<16x4xf32, #tpu.memory_space<vmem>>, vector<16x4xf32>,
    return
  }
}

</mosaic_0001>

<llo_original>
// kernel: lstm_net_forward.1
$region0: #{lstm_net_forward.1}
  #allocation0 [shape = 'u32[]', space=smem, size = 0x4, offset = 0x4, fixed_abs, tag = 'smem constant byte address 0x4 - core index']
  #allocation1 [shape = 'u32[144,128]{1,0:T(1,128)}', space=vmem, size = 0x12000, scoped, tag = 'internal scratch']
  #allocation2 [shape = 'f32[16,32]{1,0:T(8,128)}', space=vmem, size = 0x2000, scoped, tag = 'scratch operand']
  #allocation3 [shape = 'f32[16,128]{1,0:T(8,128)}', space=vmem, size = 0x2000, scoped, tag = 'scratch operand']
  %s0 = inlined_call_operand.vmem [shape: f32[16,4], index: 0, kind: input, shape index: {}]
  %s1 = inlined_call_operand.hbm [shape: f32[4,128], index: 1, kind: input, shape index: {}]
  %s2 = inlined_call_operand.vmem [shape: f32[32,128], index: 2, kind: input, shape index: {}]
  %s3 = inlined_call_operand.vmem [shape: f32[1,128], index: 3, kind: input, shape index: {}]
  %s4 = inlined_call_operand.vmem [shape: f32[32,128], index: 4, kind: input, shape index: {}]
  %s5 = inlined_call_operand.hbm [shape: f32[32,128], index: 5, kind: input, shape index: {}]
  %s6 = inlined_call_operand.vmem [shape: f32[1,128], index: 6, kind: input, shape index: {}]
  %s7 = inlined_call_operand.vmem [shape: f32[32,4], index: 7, kind: input, shape index: {}]
  %s8 = inlined_call_operand.vmem [shape: f32[1,4], index: 8, kind: input, shape index: {}]
  %s9 = inlined_call_operand.vmem [shape: f32[16,4], index: 9, kind: output, shape index: {}]
  %s10 = sld [smem:[#allocation0]]
  $region54: #{lstm_net_forward.1} parent=0
    _
  %s12 = ssub.s32 1, %s10
  %s13 = scalar_select 0, %s12, %s10
  $region1: #{lstm_net_forward.1} parent=0
    #allocation4 [shape = 'u8[2048]{0}', space=vmem, size = 0x800, scoped, tag = 'input window, operand 1, single buffered']
    #allocation5 [shape = 's32[1]{0}', space=sflag, size = 0x4, scoped, tag = 'scoped memory for lstm_net_forward.1']
    #allocation6 [shape = 'u8[16384]{0}', space=vmem, size = 0x4000, scoped, tag = 'input window, operand 5, single buffered']
    #allocation7 [shape = 's32[1]{0}', space=sflag, size = 0x4, scoped, tag = 'scoped memory for lstm_net_forward.1']
    %14 = vsyncpa [#allocation5], 0
    %15 = vsyncpa [#allocation7], 0
    // Predicated region
    $region2: #{lstm_net_forward.1} parent=1 // pred_check
      _
    $region3: #{lstm_net_forward.1} parent=1 // pred_check_branch
      %17 = sbr.rel (0) target = $region5
    $region4: #{lstm_net_forward.1} parent=1 // pred_region
      _
    $region5: #{lstm_net_forward.1} parent=1 // pred_fallthru
      _
    // Predicated region
    $region6: #{lstm_net_forward.1} parent=1 // pred_check
      _
    $region7: #{lstm_net_forward.1} parent=1 // pred_check_branch
      %19 = sbr.rel (0) target = $region9
    $region8: #{lstm_net_forward.1} parent=1 // pred_region
      %s21 = ssub.s32 64, 64
      %22 = vsyncadd [#allocation5], %s21
      %s24 = sshll.u32 [#allocation4], 4
      %s25 = int_to_ptr.vmem [resolvable:$true] %s24
      %27 = dma.hbm_to_vmem [thread:$0]  %s1, 64, %s25, [#allocation5]
    $region9: #{lstm_net_forward.1} parent=1 // pred_fallthru
      _
    // Predicated region
    $region10: #{lstm_net_forward.1} parent=1 // pred_check
      _
    $region11: #{lstm_net_forward.1} parent=1 // pred_check_branch
      %29 = sbr.rel (0) target = $region13
    $region12: #{lstm_net_forward.1} parent=1 // pred_region
      _
    $region13: #{lstm_net_forward.1} parent=1 // pred_fallthru
      _
    // Predicated region
    $region14: #{lstm_net_forward.1} parent=1 // pred_check
      _
    $region15: #{lstm_net_forward.1} parent=1 // pred_check_branch
      %31 = sbr.rel (0) target = $region17
    $region16: #{lstm_net_forward.1} parent=1 // pred_region
      _
    $region17: #{lstm_net_forward.1} parent=1 // pred_fallthru
      _
    // Predicated region
    $region18: #{lstm_net_forward.1} parent=1 // pred_check
      _
    $region19: #{lstm_net_forward.1} parent=1 // pred_check_branch
      %33 = sbr.rel (0) target = $region21
    $region20: #{lstm_net_forward.1} parent=1 // pred_region
      _
    $region21: #{lstm_net_forward.1} parent=1 // pred_fallthru
      _
    // Predicated region
    $region22: #{lstm_net_forward.1} parent=1 // pred_check
      _
    $region23: #{lstm_net_forward.1} parent=1 // pred_check_branch
      %35 = sbr.rel (0) target = $region25
    $region24: #{lstm_net_forward.1} parent=1 // pred_region
      %s37 = ssub.s32 512, 512
      %38 = vsyncadd [#allocation7], %s37
      %s39 = sshll.u32 [#allocation6], 4
      %s40 = int_to_ptr.vmem [resolvable:$true] %s39
      %45 = dma.hbm_to_vmem [thread:$0]  %s5, 512, %s40, [#allocation7], 128, 128, 8
    $region25: #{lstm_net_forward.1} parent=1 // pred_fallthru
      _
    // Predicated region
    $region26: #{lstm_net_forward.1} parent=1 // pred_check
      _
    $region27: #{lstm_net_forward.1} parent=1 // pred_check_branch
      %47 = sbr.rel (0) target = $region29
    $region28: #{lstm_net_forward.1} parent=1 // pred_region
      _
    $region29: #{lstm_net_forward.1} parent=1 // pred_fallthru
      _
    // Predicated region
    $region30: #{lstm_net_forward.1} parent=1 // pred_check
      _
    $region31: #{lstm_net_forward.1} parent=1 // pred_check_branch
      %49 = sbr.rel (0) target = $region33
    $region32: #{lstm_net_forward.1} parent=1 // pred_region
      _
    $region33: #{lstm_net_forward.1} parent=1 // pred_fallthru
      _
    // Predicated region
    $region34: #{lstm_net_forward.1} parent=1 // pred_check
      _
    $region35: #{lstm_net_forward.1} parent=1 // pred_check_branch
      %51 = sbr.rel (0) target = $region37
    $region36: #{lstm_net_forward.1} parent=1 // pred_region
      _
    $region37: #{lstm_net_forward.1} parent=1 // pred_fallthru
      _
    // Predicated region
    $region38: #{lstm_net_forward.1} parent=1 // pred_check
      _
    $region39: #{lstm_net_forward.1} parent=1 // pred_check_branch
      %53 = sbr.rel (0) target = $region41
    $region40: #{lstm_net_forward.1} parent=1 // pred_region
      %54 = dma.done [#allocation5], 64
    $region41: #{lstm_net_forward.1} parent=1 // pred_fallthru
      _
    // Predicated region
    $region42: #{lstm_net_forward.1} parent=1 // pred_check
      _
    $region43: #{lstm_net_forward.1} parent=1 // pred_check_branch
      %56 = sbr.rel (0) target = $region45
    $region44: #{lstm_net_forward.1} parent=1 // pred_region
      %57 = dma.done [#allocation7], 512
    $region45: #{lstm_net_forward.1} parent=1 // pred_fallthru
      _
    %v58 = vld [vmem:[%s0] sm:$0xff]
    %v59 = vld [vmem:[%s0 + $0x8] sm:$0xff]
    %v60 = vld [vmem:[#allocation4] sm:$0xf]
    %v61 = vld [vmem:[%s3] sm:$0x1]
    %v63 = vlaneseq
    %v64 = vshrl.u32 %v63, 7
    %v65 = vsub.s32 0, %v64
    %v66 = vrot.slane %v61, %v65
    %vm68 = vcmask 31744
    %v70 = vsel %vm68, %v58, 0
    %v73 = vsel %vm68, %v59, 0
    %vm75 = vcmask 1043456
    %v77 = vsel %vm75, %v60, 0
    %79 = vmatprep.subr.mxu0 0.0
    %80 = vmatpush1.msra.mxu0 %v77
    %81 = vmatprep.subr.mxu0 0.0
    %82 = vmatpush1.msra.mxu0 0.0
    %83 = vmatprep.subr.mxu0 0.0
    %84 = vmatpush1.msra.mxu0 0.0
    %85 = vmatprep.subr.mxu0 0.0
    %86 = vmatpush1.msra.mxu0 0.0
    %87 = vmatprep.subr.mxu0 0.0
    %88 = vmatpush1.msra.mxu0 0.0
    %89 = vmatprep.subr.mxu0 0.0
    %90 = vmatpush1.msra.mxu0 0.0
    %91 = vmatprep.subr.mxu0 0.0
    %92 = vmatpush1.msra.mxu0 0.0
    %93 = vmatprep.subr.mxu0 0.0
    %94 = vmatpush1.msra.mxu0 0.0
    %95 = vmatprep.subr.mxu0 0.0
    %96 = vmatpush1.msra.mxu0 0.0
    %97 = vmatprep.subr.mxu0 0.0
    %98 = vmatpush1.msra.mxu0 0.0
    %99 = vmatprep.subr.mxu0 0.0
    %100 = vmatpush1.msra.mxu0 0.0
    %101 = vmatprep.subr.mxu0 0.0
    %102 = vmatpush1.msra.mxu0 0.0
    %103 = vmatprep.subr.mxu0 0.0
    %104 = vmatpush1.msra.mxu0 0.0
    %105 = vmatprep.subr.mxu0 0.0
    %106 = vmatpush1.msra.mxu0 0.0
    %107 = vmatprep.subr.mxu0 0.0
    %108 = vmatpush1.msra.mxu0 0.0
    %109 = vmatprep.subr.mxu0 0.0
    %110 = vmatpush1.msra.mxu0 0.0
    %111 = vmatprep.subr.mxu0 0.0
    %112 = vmatpush1.msra.mxu0 0.0
    %113 = vmatprep.subr.mxu0 0.0
    %114 = vmatpush1.msra.mxu0 0.0
    %115 = vmatprep.subr.mxu0 0.0
    %116 = vmatpush1.msra.mxu0 0.0
    %117 = vmatprep.subr.mxu0 0.0
    %118 = vmatpush1.msra.mxu0 0.0
    %119 = vmatprep.subr.mxu0 0.0
    %120 = vmatpush1.msra.mxu0 0.0
    %121 = vmatprep.subr.mxu0 0.0
    %122 = vmatpush1.msra.mxu0 0.0
    %123 = vmatprep.subr.mxu0 0.0
    %124 = vmatpush1.msra.mxu0 0.0
    %125 = vmatprep.subr.mxu0 0.0
    %126 = vmatpush1.msra.mxu0 0.0
    %127 = vmatprep.subr.mxu0 0.0
    %128 = vmatpush1.msra.mxu0 0.0
    %129 = vmatprep.subr.mxu0 0.0
    %130 = vmatpush1.msra.mxu0 0.0
    %131 = vmatprep.subr.mxu0 0.0
    %132 = vmatpush1.msra.mxu0 0.0
    %133 = vmatprep.subr.mxu0 0.0
    %134 = vmatpush1.msra.mxu0 0.0
    %135 = vmatprep.subr.mxu0 0.0
    %136 = vmatpush1.msra.mxu0 0.0
    %137 = vmatprep.subr.mxu0 0.0
    %138 = vmatpush1.msra.mxu0 0.0
    %139 = vmatprep.subr.mxu0 0.0
    %140 = vmatpush1.msra.mxu0 0.0
    %141 = vmatprep.subr.mxu0 0.0
    %142 = vmatpush1.msra.mxu0 0.0
    %143 = vmatprep.mubr.f32.mxu0 0.0
    %144 = vmatmul.mubr.f32.gmra.mrb[0].mxu0 %v70
    %v145 = vpop.f32.mrb[0].mxu0
    %v146 = vadd.f32 %v66, %v145
    %v147 = vpop.f32.mrb[0].mxu0
    %148 = vmatprep.mubr.f32.mxu0 0.0
    %149 = vmatmul.mubr.f32.gmra.mrb[0].mxu0 %v73
    %v150 = vpop.f32.mrb[0].mxu0
    %v151 = vadd.f32 %v66, %v150
    %v152 = vpop.f32.mrb[0].mxu0
    %153 = vdwg.mxu0
    %154 = vst [vmem:[#allocation3] sm:$0xff] %v146
    %155 = vst [vmem:[#allocation3 + $0x8] sm:$0xff] %v151
    %v156 = vld [vmem:[%s2] sm:$0xff]
    %v157 = vld [vmem:[%s2 + $0x8] sm:$0xff]
    %v158 = vld [vmem:[%s2 + $0x10] sm:$0xff]
    %v159 = vld [vmem:[%s2 + $0x18] sm:$0xff]
    %v160 = vld [vmem:[#allocation3] sm:$0x3]
    %vm161 = vcmask 261120
    %v163 = vsel %vm161, 0.0, 0
    %165 = vmatprep.subr.mxu0 0.0
    %166 = vmatpush1.msra.mxu0 %v156
    %167 = vmatprep.subr.mxu0 0.0
    %168 = vmatpush1.msra.mxu0 %v157
    %169 = vmatprep.subr.mxu0 0.0
    %170 = vmatpush1.msra.mxu0 %v158
    %171 = vmatprep.subr.mxu0 0.0
    %172 = vmatpush1.msra.mxu0 %v159
    %173 = vmatprep.subr.mxu0 0.0
    %174 = vmatpush1.msra.mxu0 0.0
    %175 = vmatprep.subr.mxu0 0.0
    %176 = vmatpush1.msra.mxu0 0.0
    %177 = vmatprep.subr.mxu0 0.0
    %178 = vmatpush1.msra.mxu0 0.0
    %179 = vmatprep.subr.mxu0 0.0
    %180 = vmatpush1.msra.mxu0 0.0
    %181 = vmatprep.subr.mxu0 0.0
    %182 = vmatpush1.msra.mxu0 0.0
    %183 = vmatprep.subr.mxu0 0.0
    %184 = vmatpush1.msra.mxu0 0.0
    %185 = vmatprep.subr.mxu0 0.0
    %186 = vmatpush1.msra.mxu0 0.0
    %187 = vmatprep.subr.mxu0 0.0
    %188 = vmatpush1.msra.mxu0 0.0
    %189 = vmatprep.subr.mxu0 0.0
    %190 = vmatpush1.msra.mxu0 0.0
    %191 = vmatprep.subr.mxu0 0.0
    %192 = vmatpush1.msra.mxu0 0.0
    %193 = vmatprep.subr.mxu0 0.0
    %194 = vmatpush1.msra.mxu0 0.0
    %195 = vmatprep.subr.mxu0 0.0
    %196 = vmatpush1.msra.mxu0 0.0
    %197 = vmatprep.subr.mxu0 0.0
    %198 = vmatpush1.msra.mxu0 0.0
    %199 = vmatprep.subr.mxu0 0.0
    %200 = vmatpush1.msra.mxu0 0.0
    %201 = vmatprep.subr.mxu0 0.0
    %202 = vmatpush1.msra.mxu0 0.0
    %203 = vmatprep.subr.mxu0 0.0
    %204 = vmatpush1.msra.mxu0 0.0
    %205 = vmatprep.subr.mxu0 0.0
    %206 = vmatpush1.msra.mxu0 0.0
    %207 = vmatprep.subr.mxu0 0.0
    %208 = vmatpush1.msra.mxu0 0.0
    %209 = vmatprep.subr.mxu0 0.0
    %210 = vmatpush1.msra.mxu0 0.0
    %211 = vmatprep.subr.mxu0 0.0
    %212 = vmatpush1.msra.mxu0 0.0
    %213 = vmatprep.subr.mxu0 0.0
    %214 = vmatpush1.msra.mxu0 0.0
    %215 = vmatprep.subr.mxu0 0.0
    %216 = vmatpush1.msra.mxu0 0.0
    %217 = vmatprep.subr.mxu0 0.0
    %218 = vmatpush1.msra.mxu0 0.0
    %219 = vmatprep.subr.mxu0 0.0
    %220 = vmatpush1.msra.mxu0 0.0
    %221 = vmatprep.subr.mxu0 0.0
    %222 = vmatpush1.msra.mxu0 0.0
    %223 = vmatprep.subr.mxu0 0.0
    %224 = vmatpush1.msra.mxu0 0.0
    %225 = vmatprep.subr.mxu0 0.0
    %226 = vmatpush1.msra.mxu0 0.0
    %227 = vmatprep.subr.mxu0 0.0
    %228 = vmatpush1.msra.mxu0 0.0
    %229 = vmatprep.mubr.f32.mxu0 0.0
    %230 = vmatmul.mubr.f32.gmra.mrb[0].mxu0 %v163
    %v231 = vpop.f32.mrb[0].mxu0
    %v232 = vadd.f32 0.0, %v231
    %v233 = vpop.f32.mrb[0].mxu0
    %234 = vdwg.mxu0
    %v235 = vadd.f32 %v160, %v232
    %v236 = vxor.u32 %v235, 2147483648
    %v237 = vmul.f32 %v236, 1.442695
    %v238 = vpow.pop %v237
    %v239 = vadd.f32 %v238, 1.0
    %v240 = vrcp.pop %v239
    %v241 = vmul.f32 1.0, %v240
    %v242 = vtanh.pop %v235
    %v243 = vmul.f32 %v241, 0.0
    %245 = vrot.lane.b32.xlu0 %v242, 64
    %v246 = vpop.permute.xlu0 %245
    %v248 = vmul.f32 %v241, %v246
    %250 = vrot.lane.b32.xlu0 %v248, 32
    %v251 = vpop.permute.xlu0 %250
    %v253 = vadd.f32 %v243, %v251
    %v254 = vtanh.pop %v253
    %256 = vrot.lane.b32.xlu0 %v254, 64
    %v257 = vpop.permute.xlu0 %256
    %v259 = vmul.f32 %v241, %v257
    %261 = vrot.lane.b32.xlu0 %v259, 32
    %v262 = vpop.permute.xlu0 %261
    %vm264 = vcmask 254976
    %265 = vst.msk [vmem:[#allocation2] sm:$0x3] %vm264, %v262
    %v266 = vld [vmem:[#allocation3 + $0x2] sm:$0x3]
    %v267 = vsel %vm161, %v262, 0
    %269 = vmatprep.subr.mxu0 0.0
    %270 = vmatpush1.msra.mxu0 %v156
    %271 = vmatprep.subr.mxu0 0.0
    %272 = vmatpush1.msra.mxu0 %v157
    %273 = vmatprep.subr.mxu0 0.0
    %274 = vmatpush1.msra.mxu0 %v158
    %275 = vmatprep.subr.mxu0 0.0
    %276 = vmatpush1.msra.mxu0 %v159
    %277 = vmatprep.subr.mxu0 0.0
    %278 = vmatpush1.msra.mxu0 0.0
    %279 = vmatprep.subr.mxu0 0.0
    %280 = vmatpush1.msra.mxu0 0.0
    %281 = vmatprep.subr.mxu0 0.0
    %282 = vmatpush1.msra.mxu0 0.0
    %283 = vmatprep.subr.mxu0 0.0
    %284 = vmatpush1.msra.mxu0 0.0
    %285 = vmatprep.subr.mxu0 0.0
    %286 = vmatpush1.msra.mxu0 0.0
    %287 = vmatprep.subr.mxu0 0.0
    %288 = vmatpush1.msra.mxu0 0.0
    %289 = vmatprep.subr.mxu0 0.0
    %290 = vmatpush1.msra.mxu0 0.0
    %291 = vmatprep.subr.mxu0 0.0
    %292 = vmatpush1.msra.mxu0 0.0
    %293 = vmatprep.subr.mxu0 0.0
    %294 = vmatpush1.msra.mxu0 0.0
    %295 = vmatprep.subr.mxu0 0.0
    %296 = vmatpush1.msra.mxu0 0.0
    %297 = vmatprep.subr.mxu0 0.0
    %298 = vmatpush1.msra.mxu0 0.0
    %299 = vmatprep.subr.mxu0 0.0
    %300 = vmatpush1.msra.mxu0 0.0
    %301 = vmatprep.subr.mxu0 0.0
    %302 = vmatpush1.msra.mxu0 0.0
    %303 = vmatprep.subr.mxu0 0.0
    %304 = vmatpush1.msra.mxu0 0.0
    %305 = vmatprep.subr.mxu0 0.0
    %306 = vmatpush1.msra.mxu0 0.0
    %307 = vmatprep.subr.mxu0 0.0
    %308 = vmatpush1.msra.mxu0 0.0
    %309 = vmatprep.subr.mxu0 0.0
    %310 = vmatpush1.msra.mxu0 0.0
    %311 = vmatprep.subr.mxu0 0.0
    %312 = vmatpush1.msra.mxu0 0.0
    %313 = vmatprep.subr.mxu0 0.0
    %314 = vmatpush1.msra.mxu0 0.0
    %315 = vmatprep.subr.mxu0 0.0
    %316 = vmatpush1.msra.mxu0 0.0
    %317 = vmatprep.subr.mxu0 0.0
    %318 = vmatpush1.msra.mxu0 0.0
    %319 = vmatprep.subr.mxu0 0.0
    %320 = vmatpush1.msra.mxu0 0.0
    %321 = vmatprep.subr.mxu0 0.0
    %322 = vmatpush1.msra.mxu0 0.0
    %323 = vmatprep.subr.mxu0 0.0
    %324 = vmatpush1.msra.mxu0 0.0
    %325 = vmatprep.subr.mxu0 0.0
    %326 = vmatpush1.msra.mxu0 0.0
    %327 = vmatprep.subr.mxu0 0.0
    %328 = vmatpush1.msra.mxu0 0.0
    %329 = vmatprep.subr.mxu0 0.0
    %330 = vmatpush1.msra.mxu0 0.0
    %331 = vmatprep.subr.mxu0 0.0
    %332 = vmatpush1.msra.mxu0 0.0
    %333 = vmatprep.mubr.f32.mxu0 0.0
    %334 = vmatmul.mubr.f32.gmra.mrb[0].mxu0 %v267
    %v335 = vpop.f32.mrb[0].mxu0
    %v336 = vadd.f32 0.0, %v335
    %v337 = vpop.f32.mrb[0].mxu0
    %338 = vdwg.mxu0
    %v339 = vadd.f32 %v266, %v336
    %v340 = vxor.u32 %v339, 2147483648
    %v341 = vmul.f32 %v340, 1.442695
    %v342 = vpow.pop %v341
    %v343 = vadd.f32 %v342, 1.0
    %v344 = vrcp.pop %v343
    %v345 = vmul.f32 1.0, %v344
    %v346 = vtanh.pop %v339
    %v347 = vmul.f32 %v345, %v253
    %349 = vrot.lane.b32.xlu0 %v346, 64
    %v350 = vpop.permute.xlu0 %349
    %v352 = vmul.f32 %v345, %v350
    %354 = vrot.lane.b32.xlu0 %v352, 32
    %v355 = vpop.permute.xlu0 %354
    %v357 = vadd.f32 %v347, %v355
    %v358 = vtanh.pop %v357
    %360 = vrot.lane.b32.xlu0 %v358, 64
    %v361 = vpop.permute.xlu0 %360
    %v363 = vmul.f32 %v345, %v361
    %365 = vrot.lane.b32.xlu0 %v363, 32
    %v366 = vpop.permute.xlu0 %365
    %368 = vst.msk [vmem:[#allocation2 + $0x2] sm:$0x3] %vm264, %v366
    %v369 = vld [vmem:[#allocation3 + $0x4] sm:$0x3]
    %v370 = vsel %vm161, %v366, 0
    %372 = vmatprep.subr.mxu0 0.0
    %373 = vmatpush1.msra.mxu0 %v156
    %374 = vmatprep.subr.mxu0 0.0
    %375 = vmatpush1.msra.mxu0 %v157
    %376 = vmatprep.subr.mxu0 0.0
    %377 = vmatpush1.msra.mxu0 %v158
    %378 = vmatprep.subr.mxu0 0.0
    %379 = vmatpush1.msra.mxu0 %v159
    %380 = vmatprep.subr.mxu0 0.0
    %381 = vmatpush1.msra.mxu0 0.0
    %382 = vmatprep.subr.mxu0 0.0
    %383 = vmatpush1.msra.mxu0 0.0
    %384 = vmatprep.subr.mxu0 0.0
    %385 = vmatpush1.msra.mxu0 0.0
    %386 = vmatprep.subr.mxu0 0.0
    %387 = vmatpush1.msra.mxu0 0.0
    %388 = vmatprep.subr.mxu0 0.0
    %389 = vmatpush1.msra.mxu0 0.0
    %390 = vmatprep.subr.mxu0 0.0
    %391 = vmatpush1.msra.mxu0 0.0
    %392 = vmatprep.subr.mxu0 0.0
    %393 = vmatpush1.msra.mxu0 0.0
    %394 = vmatprep.subr.mxu0 0.0
    %395 = vmatpush1.msra.mxu0 0.0
    %396 = vmatprep.subr.mxu0 0.0
    %397 = vmatpush1.msra.mxu0 0.0
    %398 = vmatprep.subr.mxu0 0.0
    %399 = vmatpush1.msra.mxu0 0.0
    %400 = vmatprep.subr.mxu0 0.0
    %401 = vmatpush1.msra.mxu0 0.0
    %402 = vmatprep.subr.mxu0 0.0
    %403 = vmatpush1.msra.mxu0 0.0
    %404 = vmatprep.subr.mxu0 0.0
    %405 = vmatpush1.msra.mxu0 0.0
    %406 = vmatprep.subr.mxu0 0.0
    %407 = vmatpush1.msra.mxu0 0.0
    %408 = vmatprep.subr.mxu0 0.0
    %409 = vmatpush1.msra.mxu0 0.0
    %410 = vmatprep.subr.mxu0 0.0
    %411 = vmatpush1.msra.mxu0 0.0
    %412 = vmatprep.subr.mxu0 0.0
    %413 = vmatpush1.msra.mxu0 0.0
    %414 = vmatprep.subr.mxu0 0.0
    %415 = vmatpush1.msra.mxu0 0.0
    %416 = vmatprep.subr.mxu0 0.0
    %417 = vmatpush1.msra.mxu0 0.0
    %418 = vmatprep.subr.mxu0 0.0
    %419 = vmatpush1.msra.mxu0 0.0
    %420 = vmatprep.subr.mxu0 0.0
    %421 = vmatpush1.msra.mxu0 0.0
    %422 = vmatprep.subr.mxu0 0.0
    %423 = vmatpush1.msra.mxu0 0.0
    %424 = vmatprep.subr.mxu0 0.0
    %425 = vmatpush1.msra.mxu0 0.0
    %426 = vmatprep.subr.mxu0 0.0
    %427 = vmatpush1.msra.mxu0 0.0
    %428 = vmatprep.subr.mxu0 0.0
    %429 = vmatpush1.msra.mxu0 0.0
    %430 = vmatprep.subr.mxu0 0.0
    %431 = vmatpush1.msra.mxu0 0.0
    %432 = vmatprep.subr.mxu0 0.0
    %433 = vmatpush1.msra.mxu0 0.0
    %434 = vmatprep.subr.mxu0 0.0
    %435 = vmatpush1.msra.mxu0 0.0
    %436 = vmatprep.mubr.f32.mxu0 0.0
    %437 = vmatmul.mubr.f32.gmra.mrb[0].mxu0 %v370
    %v438 = vpop.f32.mrb[0].mxu0
    %v439 = vadd.f32 0.0, %v438
    %v440 = vpop.f32.mrb[0].mxu0
    %441 = vdwg.mxu0
    %v442 = vadd.f32 %v369, %v439
    %v443 = vxor.u32 %v442, 2147483648
    %v444 = vmul.f32 %v443, 1.442695
    %v445 = vpow.pop %v444
    %v446 = vadd.f32 %v445, 1.0
    %v447 = vrcp.pop %v446
    %v448 = vmul.f32 1.0, %v447
    %v449 = vtanh.pop %v442
    %v450 = vmul.f32 %v448, %v357
    %452 = vrot.lane.b32.xlu0 %v449, 64
    %v453 = vpop.permute.xlu0 %452
    %v455 = vmul.f32 %v448, %v453
    %457 = vrot.lane.b32.xlu0 %v455, 32
    %v458 = vpop.permute.xlu0 %457
    %v460 = vadd.f32 %v450, %v458
    %v461 = vtanh.pop %v460
    %463 = vrot.lane.b32.xlu0 %v461, 64
    %v464 = vpop.permute.xlu0 %463
    %v466 = vmul.f32 %v448, %v464
    %468 = vrot.lane.b32.xlu0 %v466, 32
    %v469 = vpop.permute.xlu0 %468
    %471 = vst.msk [vmem:[#allocation2 + $0x4] sm:$0x3] %vm264, %v469
    %v472 = vld [vmem:[#allocation3 + $0x6] sm:$0x3]
    %v473 = vsel %vm161, %v469, 0
    %475 = vmatprep.subr.mxu0 0.0
    %476 = vmatpush1.msra.mxu0 %v156
    %477 = vmatprep.subr.mxu0 0.0
    %478 = vmatpush1.msra.mxu0 %v157
    %479 = vmatprep.subr.mxu0 0.0
    %480 = vmatpush1.msra.mxu0 %v158
    %481 = vmatprep.subr.mxu0 0.0
    %482 = vmatpush1.msra.mxu0 %v159
    %483 = vmatprep.subr.mxu0 0.0
    %484 = vmatpush1.msra.mxu0 0.0
    %485 = vmatprep.subr.mxu0 0.0
    %486 = vmatpush1.msra.mxu0 0.0
    %487 = vmatprep.subr.mxu0 0.0
    %488 = vmatpush1.msra.mxu0 0.0
    %489 = vmatprep.subr.mxu0 0.0
    %490 = vmatpush1.msra.mxu0 0.0
    %491 = vmatprep.subr.mxu0 0.0
    %492 = vmatpush1.msra.mxu0 0.0
    %493 = vmatprep.subr.mxu0 0.0
    %494 = vmatpush1.msra.mxu0 0.0
    %495 = vmatprep.subr.mxu0 0.0
    %496 = vmatpush1.msra.mxu0 0.0
    %497 = vmatprep.subr.mxu0 0.0
    %498 = vmatpush1.msra.mxu0 0.0
    %499 = vmatprep.subr.mxu0 0.0
    %500 = vmatpush1.msra.mxu0 0.0
    %501 = vmatprep.subr.mxu0 0.0
    %502 = vmatpush1.msra.mxu0 0.0
    %503 = vmatprep.subr.mxu0 0.0
    %504 = vmatpush1.msra.mxu0 0.0
    %505 = vmatprep.subr.mxu0 0.0
    %506 = vmatpush1.msra.mxu0 0.0
    %507 = vmatprep.subr.mxu0 0.0
    %508 = vmatpush1.msra.mxu0 0.0
    %509 = vmatprep.subr.mxu0 0.0
    %510 = vmatpush1.msra.mxu0 0.0
    %511 = vmatprep.subr.mxu0 0.0
    %512 = vmatpush1.msra.mxu0 0.0
    %513 = vmatprep.subr.mxu0 0.0
    %514 = vmatpush1.msra.mxu0 0.0
    %515 = vmatprep.subr.mxu0 0.0
    %516 = vmatpush1.msra.mxu0 0.0
    %517 = vmatprep.subr.mxu0 0.0
    %518 = vmatpush1.msra.mxu0 0.0
    %519 = vmatprep.subr.mxu0 0.0
    %520 = vmatpush1.msra.mxu0 0.0
    %521 = vmatprep.subr.mxu0 0.0
    %522 = vmatpush1.msra.mxu0 0.0
    %523 = vmatprep.subr.mxu0 0.0
    %524 = vmatpush1.msra.mxu0 0.0
    %525 = vmatprep.subr.mxu0 0.0
    %526 = vmatpush1.msra.mxu0 0.0
    %527 = vmatprep.subr.mxu0 0.0
    %528 = vmatpush1.msra.mxu0 0.0
    %529 = vmatprep.subr.mxu0 0.0
    %530 = vmatpush1.msra.mxu0 0.0
    %531 = vmatprep.subr.mxu0 0.0
    %532 = vmatpush1.msra.mxu0 0.0
    %533 = vmatprep.subr.mxu0 0.0
    %534 = vmatpush1.msra.mxu0 0.0
    %535 = vmatprep.subr.mxu0 0.0
    %536 = vmatpush1.msra.mxu0 0.0
    %537 = vmatprep.subr.mxu0 0.0
    %538 = vmatpush1.msra.mxu0 0.0
    %539 = vmatprep.mubr.f32.mxu0 0.0
    %540 = vmatmul.mubr.f32.gmra.mrb[0].mxu0 %v473
    %v541 = vpop.f32.mrb[0].mxu0
    %v542 = vadd.f32 0.0, %v541
    %v543 = vpop.f32.mrb[0].mxu0
    %544 = vdwg.mxu0
    %v545 = vadd.f32 %v472, %v542
    %v546 = vxor.u32 %v545, 2147483648
    %v547 = vmul.f32 %v546, 1.442695
    %v548 = vpow.pop %v547
    %v549 = vadd.f32 %v548, 1.0
    %v550 = vrcp.pop %v549
    %v551 = vmul.f32 1.0, %v550
    %v552 = vtanh.pop %v545
    %v553 = vmul.f32 %v551, %v460
    %555 = vrot.lane.b32.xlu0 %v552, 64
    %v556 = vpop.permute.xlu0 %555
    %v558 = vmul.f32 %v551, %v556
    %560 = vrot.lane.b32.xlu0 %v558, 32
    %v561 = vpop.permute.xlu0 %560
    %v563 = vadd.f32 %v553, %v561
    %v564 = vtanh.pop %v563
    %566 = vrot.lane.b32.xlu0 %v564, 64
    %v567 = vpop.permute.xlu0 %566
    %v569 = vmul.f32 %v551, %v567
    %571 = vrot.lane.b32.xlu0 %v569, 32
    %v572 = vpop.permute.xlu0 %571
    %574 = vst.msk [vmem:[#allocation2 + $0x6] sm:$0x3] %vm264, %v572
    %v575 = vld [vmem:[#allocation3 + $0x8] sm:$0x3]
    %v576 = vsel %vm161, %v572, 0
    %578 = vmatprep.subr.mxu0 0.0
    %579 = vmatpush1.msra.mxu0 %v156
    %580 = vmatprep.subr.mxu0 0.0
    %581 = vmatpush1.msra.mxu0 %v157
    %582 = vmatprep.subr.mxu0 0.0
    %583 = vmatpush1.msra.mxu0 %v158
    %584 = vmatprep.subr.mxu0 0.0
    %585 = vmatpush1.msra.mxu0 %v159
    %586 = vmatprep.subr.mxu0 0.0
    %587 = vmatpush1.msra.mxu0 0.0
    %588 = vmatprep.subr.mxu0 0.0
    %589 = vmatpush1.msra.mxu0 0.0
    %590 = vmatprep.subr.mxu0 0.0
    %591 = vmatpush1.msra.mxu0 0.0
    %592 = vmatprep.subr.mxu0 0.0
    %593 = vmatpush1.msra.mxu0 0.0
    %594 = vmatprep.subr.mxu0 0.0
    %595 = vmatpush1.msra.mxu0 0.0
    %596 = vmatprep.subr.mxu0 0.0
    %597 = vmatpush1.msra.mxu0 0.0
    %598 = vmatprep.subr.mxu0 0.0
    %599 = vmatpush1.msra.mxu0 0.0
    %600 = vmatprep.subr.mxu0 0.0
    %601 = vmatpush1.msra.mxu0 0.0
    %602 = vmatprep.subr.mxu0 0.0
    %603 = vmatpush1.msra.mxu0 0.0
    %604 = vmatprep.subr.mxu0 0.0
    %605 = vmatpush1.msra.mxu0 0.0
    %606 = vmatprep.subr.mxu0 0.0
    %607 = vmatpush1.msra.mxu0 0.0
    %608 = vmatprep.subr.mxu0 0.0
    %609 = vmatpush1.msra.mxu0 0.0
    %610 = vmatprep.subr.mxu0 0.0
    %611 = vmatpush1.msra.mxu0 0.0
    %612 = vmatprep.subr.mxu0 0.0
    %613 = vmatpush1.msra.mxu0 0.0
    %614 = vmatprep.subr.mxu0 0.0
    %615 = vmatpush1.msra.mxu0 0.0
    %616 = vmatprep.subr.mxu0 0.0
    %617 = vmatpush1.msra.mxu0 0.0
    %618 = vmatprep.subr.mxu0 0.0
    %619 = vmatpush1.msra.mxu0 0.0
    %620 = vmatprep.subr.mxu0 0.0
    %621 = vmatpush1.msra.mxu0 0.0
    %622 = vmatprep.subr.mxu0 0.0
    %623 = vmatpush1.msra.mxu0 0.0
    %624 = vmatprep.subr.mxu0 0.0
    %625 = vmatpush1.msra.mxu0 0.0
    %626 = vmatprep.subr.mxu0 0.0
    %627 = vmatpush1.msra.mxu0 0.0
    %628 = vmatprep.subr.mxu0 0.0
    %629 = vmatpush1.msra.mxu0 0.0
    %630 = vmatprep.subr.mxu0 0.0
    %631 = vmatpush1.msra.mxu0 0.0
    %632 = vmatprep.subr.mxu0 0.0
    %633 = vmatpush1.msra.mxu0 0.0
    %634 = vmatprep.subr.mxu0 0.0
    %635 = vmatpush1.msra.mxu0 0.0
    %636 = vmatprep.subr.mxu0 0.0
    %637 = vmatpush1.msra.mxu0 0.0
    %638 = vmatprep.subr.mxu0 0.0
    %639 = vmatpush1.msra.mxu0 0.0
    %640 = vmatprep.subr.mxu0 0.0
    %641 = vmatpush1.msra.mxu0 0.0
    %642 = vmatprep.mubr.f32.mxu0 0.0
    %643 = vmatmul.mubr.f32.gmra.mrb[0].mxu0 %v576
    %v644 = vpop.f32.mrb[0].mxu0
    %v645 = vadd.f32 0.0, %v644
    %v646 = vpop.f32.mrb[0].mxu0
    %647 = vdwg.mxu0
    %v648 = vadd.f32 %v575, %v645
    %v649 = vxor.u32 %v648, 2147483648
    %v650 = vmul.f32 %v649, 1.442695
    %v651 = vpow.pop %v650
    %v652 = vadd.f32 %v651, 1.0
    %v653 = vrcp.pop %v652
    %v654 = vmul.f32 1.0, %v653
    %v655 = vtanh.pop %v648
    %v656 = vmul.f32 %v654, %v563
    %658 = vrot.lane.b32.xlu0 %v655, 64
    %v659 = vpop.permute.xlu0 %658
    %v661 = vmul.f32 %v654, %v659
    %663 = vrot.lane.b32.xlu0 %v661, 32
    %v664 = vpop.permute.xlu0 %663
    %v666 = vadd.f32 %v656, %v664
    %v667 = vtanh.pop %v666
    %669 = vrot.lane.b32.xlu0 %v667, 64
    %v670 = vpop.permute.xlu0 %669
    %v672 = vmul.f32 %v654, %v670
    %674 = vrot.lane.b32.xlu0 %v672, 32
    %v675 = vpop.permute.xlu0 %674
    %677 = vst.msk [vmem:[#allocation2 + $0x8] sm:$0x3] %vm264, %v675
    %v678 = vld [vmem:[#allocation3 + $0xa] sm:$0x3]
    %v679 = vsel %vm161, %v675, 0
    %681 = vmatprep.subr.mxu0 0.0
    %682 = vmatpush1.msra.mxu0 %v156
    %683 = vmatprep.subr.mxu0 0.0
    %684 = vmatpush1.msra.mxu0 %v157
    %685 = vmatprep.subr.mxu0 0.0
    %686 = vmatpush1.msra.mxu0 %v158
    %687 = vmatprep.subr.mxu0 0.0
    %688 = vmatpush1.msra.mxu0 %v159
    %689 = vmatprep.subr.mxu0 0.0
    %690 = vmatpush1.msra.mxu0 0.0
    %691 = vmatprep.subr.mxu0 0.0
    %692 = vmatpush1.msra.mxu0 0.0
    %693 = vmatprep.subr.mxu0 0.0
    %694 = vmatpush1.msra.mxu0 0.0
    %695 = vmatprep.subr.mxu0 0.0
    %696 = vmatpush1.msra.mxu0 0.0
    %697 = vmatprep.subr.mxu0 0.0
    %698 = vmatpush1.msra.mxu0 0.0
    %699 = vmatprep.subr.mxu0 0.0
    %700 = vmatpush1.msra.mxu0 0.0
    %701 = vmatprep.subr.mxu0 0.0
    %702 = vmatpush1.msra.mxu0 0.0
    %703 = vmatprep.subr.mxu0 0.0
    %704 = vmatpush1.msra.mxu0 0.0
    %705 = vmatprep.subr.mxu0 0.0
    %706 = vmatpush1.msra.mxu0 0.0
    %707 = vmatprep.subr.mxu0 0.0
    %708 = vmatpush1.msra.mxu0 0.0
    %709 = vmatprep.subr.mxu0 0.0
    %710 = vmatpush1.msra.mxu0 0.0
    %711 = vmatprep.subr.mxu0 0.0
    %712 = vmatpush1.msra.mxu0 0.0
    %713 = vmatprep.subr.mxu0 0.0
    %714 = vmatpush1.msra.mxu0 0.0
    %715 = vmatprep.subr.mxu0 0.0
    %716 = vmatpush1.msra.mxu0 0.0
    %717 = vmatprep.subr.mxu0 0.0
    %718 = vmatpush1.msra.mxu0 0.0
    %719 = vmatprep.subr.mxu0 0.0
    %720 = vmatpush1.msra.mxu0 0.0
    %721 = vmatprep.subr.mxu0 0.0
    %722 = vmatpush1.msra.mxu0 0.0
    %723 = vmatprep.subr.mxu0 0.0
    %724 = vmatpush1.msra.mxu0 0.0
    %725 = vmatprep.subr.mxu0 0.0
    %726 = vmatpush1.msra.mxu0 0.0
    %727 = vmatprep.subr.mxu0 0.0
    %728 = vmatpush1.msra.mxu0 0.0
    %729 = vmatprep.subr.mxu0 0.0
    %730 = vmatpush1.msra.mxu0 0.0
    %731 = vmatprep.subr.mxu0 0.0
    %732 = vmatpush1.msra.mxu0 0.0
    %733 = vmatprep.subr.mxu0 0.0
    %734 = vmatpush1.msra.mxu0 0.0
    %735 = vmatprep.subr.mxu0 0.0
    %736 = vmatpush1.msra.mxu0 0.0
    %737 = vmatprep.subr.mxu0 0.0
    %738 = vmatpush1.msra.mxu0 0.0
    %739 = vmatprep.subr.mxu0 0.0
    %740 = vmatpush1.msra.mxu0 0.0
    %741 = vmatprep.subr.mxu0 0.0
    %742 = vmatpush1.msra.mxu0 0.0
    %743 = vmatprep.subr.mxu0 0.0
    %744 = vmatpush1.msra.mxu0 0.0
    %745 = vmatprep.mubr.f32.mxu0 0.0
    %746 = vmatmul.mubr.f32.gmra.mrb[0].mxu0 %v679
    %v747 = vpop.f32.mrb[0].mxu0
    %v748 = vadd.f32 0.0, %v747
    %v749 = vpop.f32.mrb[0].mxu0
    %750 = vdwg.mxu0
    %v751 = vadd.f32 %v678, %v748
    %v752 = vxor.u32 %v751, 2147483648
    %v753 = vmul.f32 %v752, 1.442695
    %v754 = vpow.pop %v753
    %v755 = vadd.f32 %v754, 1.0
    %v756 = vrcp.pop %v755
    %v757 = vmul.f32 1.0, %v756
    %v758 = vtanh.pop %v751
    %v759 = vmul.f32 %v757, %v666
    %761 = vrot.lane.b32.xlu0 %v758, 64
    %v762 = vpop.permute.xlu0 %761
    %v764 = vmul.f32 %v757, %v762
    %766 = vrot.lane.b32.xlu0 %v764, 32
    %v767 = vpop.permute.xlu0 %766
    %v769 = vadd.f32 %v759, %v767
    %v770 = vtanh.pop %v769
    %772 = vrot.lane.b32.xlu0 %v770, 64
    %v773 = vpop.permute.xlu0 %772
    %v775 = vmul.f32 %v757, %v773
    %777 = vrot.lane.b32.xlu0 %v775, 32
    %v778 = vpop.permute.xlu0 %777
    %780 = vst.msk [vmem:[#allocation2 + $0xa] sm:$0x3] %vm264, %v778
    %v781 = vld [vmem:[#allocation3 + $0xc] sm:$0x3]
    %v782 = vsel %vm161, %v778, 0
    %784 = vmatprep.subr.mxu0 0.0
    %785 = vmatpush1.msra.mxu0 %v156
    %786 = vmatprep.subr.mxu0 0.0
    %787 = vmatpush1.msra.mxu0 %v157
    %788 = vmatprep.subr.mxu0 0.0
    %789 = vmatpush1.msra.mxu0 %v158
    %790 = vmatprep.subr.mxu0 0.0
    %791 = vmatpush1.msra.mxu0 %v159
    %792 = vmatprep.subr.mxu0 0.0
    %793 = vmatpush1.msra.mxu0 0.0
    %794 = vmatprep.subr.mxu0 0.0
    %795 = vmatpush1.msra.mxu0 0.0
    %796 = vmatprep.subr.mxu0 0.0
    %797 = vmatpush1.msra.mxu0 0.0
    %798 = vmatprep.subr.mxu0 0.0
    %799 = vmatpush1.msra.mxu0 0.0
    %800 = vmatprep.subr.mxu0 0.0
    %801 = vmatpush1.msra.mxu0 0.0
    %802 = vmatprep.subr.mxu0 0.0
    %803 = vmatpush1.msra.mxu0 0.0
    %804 = vmatprep.subr.mxu0 0.0
    %805 = vmatpush1.msra.mxu0 0.0
    %806 = vmatprep.subr.mxu0 0.0
    %807 = vmatpush1.msra.mxu0 0.0
    %808 = vmatprep.subr.mxu0 0.0
    %809 = vmatpush1.msra.mxu0 0.0
    %810 = vmatprep.subr.mxu0 0.0
    %811 = vmatpush1.msra.mxu0 0.0
    %812 = vmatprep.subr.mxu0 0.0
    %813 = vmatpush1.msra.mxu0 0.0
    %814 = vmatprep.subr.mxu0 0.0
    %815 = vmatpush1.msra.mxu0 0.0
    %816 = vmatprep.subr.mxu0 0.0
    %817 = vmatpush1.msra.mxu0 0.0
    %818 = vmatprep.subr.mxu0 0.0
    %819 = vmatpush1.msra.mxu0 0.0
    %820 = vmatprep.subr.mxu0 0.0
    %821 = vmatpush1.msra.mxu0 0.0
    %822 = vmatprep.subr.mxu0 0.0
    %823 = vmatpush1.msra.mxu0 0.0
    %824 = vmatprep.subr.mxu0 0.0
    %825 = vmatpush1.msra.mxu0 0.0
    %826 = vmatprep.subr.mxu0 0.0
    %827 = vmatpush1.msra.mxu0 0.0
    %828 = vmatprep.subr.mxu0 0.0
    %829 = vmatpush1.msra.mxu0 0.0
    %830 = vmatprep.subr.mxu0 0.0
    %831 = vmatpush1.msra.mxu0 0.0
    %832 = vmatprep.subr.mxu0 0.0
    %833 = vmatpush1.msra.mxu0 0.0
    %834 = vmatprep.subr.mxu0 0.0
    %835 = vmatpush1.msra.mxu0 0.0
    %836 = vmatprep.subr.mxu0 0.0
    %837 = vmatpush1.msra.mxu0 0.0
    %838 = vmatprep.subr.mxu0 0.0
    %839 = vmatpush1.msra.mxu0 0.0
    %840 = vmatprep.subr.mxu0 0.0
    %841 = vmatpush1.msra.mxu0 0.0
    %842 = vmatprep.subr.mxu0 0.0
    %843 = vmatpush1.msra.mxu0 0.0
    %844 = vmatprep.subr.mxu0 0.0
    %845 = vmatpush1.msra.mxu0 0.0
    %846 = vmatprep.subr.mxu0 0.0
    %847 = vmatpush1.msra.mxu0 0.0
    %848 = vmatprep.mubr.f32.mxu0 0.0
    %849 = vmatmul.mubr.f32.gmra.mrb[0].mxu0 %v782
    %v850 = vpop.f32.mrb[0].mxu0
    %v851 = vadd.f32 0.0, %v850
    %v852 = vpop.f32.mrb[0].mxu0
    %853 = vdwg.mxu0
    %v854 = vadd.f32 %v781, %v851
    %v855 = vxor.u32 %v854, 2147483648
    %v856 = vmul.f32 %v855, 1.442695
    %v857 = vpow.pop %v856
    %v858 = vadd.f32 %v857, 1.0
    %v859 = vrcp.pop %v858
    %v860 = vmul.f32 1.0, %v859
    %v861 = vtanh.pop %v854
    %v862 = vmul.f32 %v860, %v769
    %864 = vrot.lane.b32.xlu0 %v861, 64
    %v865 = vpop.permute.xlu0 %864
    %v867 = vmul.f32 %v860, %v865
    %869 = vrot.lane.b32.xlu0 %v867, 32
    %v870 = vpop.permute.xlu0 %869
    %v872 = vadd.f32 %v862, %v870
    %v873 = vtanh.pop %v872
    %875 = vrot.lane.b32.xlu0 %v873, 64
    %v876 = vpop.permute.xlu0 %875
    %v878 = vmul.f32 %v860, %v876
    %880 = vrot.lane.b32.xlu0 %v878, 32
    %v881 = vpop.permute.xlu0 %880
    %883 = vst.msk [vmem:[#allocation2 + $0xc] sm:$0x3] %vm264, %v881
    %v884 = vld [vmem:[#allocation3 + $0xe] sm:$0x3]
    %v885 = vsel %vm161, %v881, 0
    %887 = vmatprep.subr.mxu0 0.0
    %888 = vmatpush1.msra.mxu0 %v156
    %889 = vmatprep.subr.mxu0 0.0
    %890 = vmatpush1.msra.mxu0 %v157
    %891 = vmatprep.subr.mxu0 0.0
    %892 = vmatpush1.msra.mxu0 %v158
    %893 = vmatprep.subr.mxu0 0.0
    %894 = vmatpush1.msra.mxu0 %v159
    %895 = vmatprep.subr.mxu0 0.0
    %896 = vmatpush1.msra.mxu0 0.0
    %897 = vmatprep.subr.mxu0 0.0
    %898 = vmatpush1.msra.mxu0 0.0
    %899 = vmatprep.subr.mxu0 0.0
    %900 = vmatpush1.msra.mxu0 0.0
    %901 = vmatprep.subr.mxu0 0.0
    %902 = vmatpush1.msra.mxu0 0.0
    %903 = vmatprep.subr.mxu0 0.0
    %904 = vmatpush1.msra.mxu0 0.0
    %905 = vmatprep.subr.mxu0 0.0
    %906 = vmatpush1.msra.mxu0 0.0
    %907 = vmatprep.subr.mxu0 0.0
    %908 = vmatpush1.msra.mxu0 0.0
    %909 = vmatprep.subr.mxu0 0.0
    %910 = vmatpush1.msra.mxu0 0.0
    %911 = vmatprep.subr.mxu0 0.0
    %912 = vmatpush1.msra.mxu0 0.0
    %913 = vmatprep.subr.mxu0 0.0
    %914 = vmatpush1.msra.mxu0 0.0
    %915 = vmatprep.subr.mxu0 0.0
    %916 = vmatpush1.msra.mxu0 0.0
    %917 = vmatprep.subr.mxu0 0.0
    %918 = vmatpush1.msra.mxu0 0.0
    %919 = vmatprep.subr.mxu0 0.0
    %920 = vmatpush1.msra.mxu0 0.0
    %921 = vmatprep.subr.mxu0 0.0
    %922 = vmatpush1.msra.mxu0 0.0
    %923 = vmatprep.subr.mxu0 0.0
    %924 = vmatpush1.msra.mxu0 0.0
    %925 = vmatprep.subr.mxu0 0.0
    %926 = vmatpush1.msra.mxu0 0.0
    %927 = vmatprep.subr.mxu0 0.0
    %928 = vmatpush1.msra.mxu0 0.0
    %929 = vmatprep.subr.mxu0 0.0
    %930 = vmatpush1.msra.mxu0 0.0
    %931 = vmatprep.subr.mxu0 0.0
    %932 = vmatpush1.msra.mxu0 0.0
    %933 = vmatprep.subr.mxu0 0.0
    %934 = vmatpush1.msra.mxu0 0.0
    %935 = vmatprep.subr.mxu0 0.0
    %936 = vmatpush1.msra.mxu0 0.0
    %937 = vmatprep.subr.mxu0 0.0
    %938 = vmatpush1.msra.mxu0 0.0
    %939 = vmatprep.subr.mxu0 0.0
    %940 = vmatpush1.msra.mxu0 0.0
    %941 = vmatprep.subr.mxu0 0.0
    %942 = vmatpush1.msra.mxu0 0.0
    %943 = vmatprep.subr.mxu0 0.0
    %944 = vmatpush1.msra.mxu0 0.0
    %945 = vmatprep.subr.mxu0 0.0
    %946 = vmatpush1.msra.mxu0 0.0
    %947 = vmatprep.subr.mxu0 0.0
    %948 = vmatpush1.msra.mxu0 0.0
    %949 = vmatprep.subr.mxu0 0.0
    %950 = vmatpush1.msra.mxu0 0.0
    %951 = vmatprep.mubr.f32.mxu0 0.0
    %952 = vmatmul.mubr.f32.gmra.mrb[0].mxu0 %v885
    %v953 = vpop.f32.mrb[0].mxu0
    %v954 = vadd.f32 0.0, %v953
    %v955 = vpop.f32.mrb[0].mxu0
    %956 = vdwg.mxu0
    %v957 = vadd.f32 %v884, %v954
    %v958 = vxor.u32 %v957, 2147483648
    %v959 = vmul.f32 %v958, 1.442695
    %v960 = vpow.pop %v959
    %v961 = vadd.f32 %v960, 1.0
    %v962 = vrcp.pop %v961
    %v963 = vmul.f32 1.0, %v962
    %v964 = vtanh.pop %v957
    %v965 = vmul.f32 %v963, %v872
    %967 = vrot.lane.b32.xlu0 %v964, 64
    %v968 = vpop.permute.xlu0 %967
    %v970 = vmul.f32 %v963, %v968
    %972 = vrot.lane.b32.xlu0 %v970, 32
    %v973 = vpop.permute.xlu0 %972
    %v975 = vadd.f32 %v965, %v973
    %v976 = vtanh.pop %v975
    %978 = vrot.lane.b32.xlu0 %v976, 64
    %v979 = vpop.permute.xlu0 %978
    %v981 = vmul.f32 %v963, %v979
    %983 = vrot.lane.b32.xlu0 %v981, 32
    %v984 = vpop.permute.xlu0 %983
    %986 = vst.msk [vmem:[#allocation2 + $0xe] sm:$0x3] %vm264, %v984
    %v987 = vld [vmem:[#allocation2] sm:$0xff]
    %v988 = vld [vmem:[#allocation2 + $0x8] sm:$0xff]
    %v989 = vld [vmem:[%s4] sm:$0xff]
    %v990 = vld [vmem:[%s4 + $0x8] sm:$0xff]
    %v991 = vld [vmem:[%s4 + $0x10] sm:$0xff]
    %v992 = vld [vmem:[%s4 + $0x18] sm:$0xff]
    %v993 = vld [vmem:[%s6] sm:$0x1]
    %v995 = vlaneseq
    %v996 = vshrl.u32 %v995, 7
    %v997 = vsub.s32 0, %v996
    %v998 = vrot.slane %v993, %v997
    %v1001 = vsel %vm161, %v987, 0
    %v1004 = vsel %vm161, %v988, 0
    %1006 = vmatprep.subr.mxu0 0.0
    %1007 = vmatpush1.msra.mxu0 %v989
    %1008 = vmatprep.subr.mxu0 0.0
    %1009 = vmatpush1.msra.mxu0 %v990
    %1010 = vmatprep.subr.mxu0 0.0
    %1011 = vmatpush1.msra.mxu0 %v991
    %1012 = vmatprep.subr.mxu0 0.0
    %1013 = vmatpush1.msra.mxu0 %v992
    %1014 = vmatprep.subr.mxu0 0.0
    %1015 = vmatpush1.msra.mxu0 0.0
    %1016 = vmatprep.subr.mxu0 0.0
    %1017 = vmatpush1.msra.mxu0 0.0
    %1018 = vmatprep.subr.mxu0 0.0
    %1019 = vmatpush1.msra.mxu0 0.0
    %1020 = vmatprep.subr.mxu0 0.0
    %1021 = vmatpush1.msra.mxu0 0.0
    %1022 = vmatprep.subr.mxu0 0.0
    %1023 = vmatpush1.msra.mxu0 0.0
    %1024 = vmatprep.subr.mxu0 0.0
    %1025 = vmatpush1.msra.mxu0 0.0
    %1026 = vmatprep.subr.mxu0 0.0
    %1027 = vmatpush1.msra.mxu0 0.0
    %1028 = vmatprep.subr.mxu0 0.0
    %1029 = vmatpush1.msra.mxu0 0.0
    %1030 = vmatprep.subr.mxu0 0.0
    %1031 = vmatpush1.msra.mxu0 0.0
    %1032 = vmatprep.subr.mxu0 0.0
    %1033 = vmatpush1.msra.mxu0 0.0
    %1034 = vmatprep.subr.mxu0 0.0
    %1035 = vmatpush1.msra.mxu0 0.0
    %1036 = vmatprep.subr.mxu0 0.0
    %1037 = vmatpush1.msra.mxu0 0.0
    %1038 = vmatprep.subr.mxu0 0.0
    %1039 = vmatpush1.msra.mxu0 0.0
    %1040 = vmatprep.subr.mxu0 0.0
    %1041 = vmatpush1.msra.mxu0 0.0
    %1042 = vmatprep.subr.mxu0 0.0
    %1043 = vmatpush1.msra.mxu0 0.0
    %1044 = vmatprep.subr.mxu0 0.0
    %1045 = vmatpush1.msra.mxu0 0.0
    %1046 = vmatprep.subr.mxu0 0.0
    %1047 = vmatpush1.msra.mxu0 0.0
    %1048 = vmatprep.subr.mxu0 0.0
    %1049 = vmatpush1.msra.mxu0 0.0
    %1050 = vmatprep.subr.mxu0 0.0
    %1051 = vmatpush1.msra.mxu0 0.0
    %1052 = vmatprep.subr.mxu0 0.0
    %1053 = vmatpush1.msra.mxu0 0.0
    %1054 = vmatprep.subr.mxu0 0.0
    %1055 = vmatpush1.msra.mxu0 0.0
    %1056 = vmatprep.subr.mxu0 0.0
    %1057 = vmatpush1.msra.mxu0 0.0
    %1058 = vmatprep.subr.mxu0 0.0
    %1059 = vmatpush1.msra.mxu0 0.0
    %1060 = vmatprep.subr.mxu0 0.0
    %1061 = vmatpush1.msra.mxu0 0.0
    %1062 = vmatprep.subr.mxu0 0.0
    %1063 = vmatpush1.msra.mxu0 0.0
    %1064 = vmatprep.subr.mxu0 0.0
    %1065 = vmatpush1.msra.mxu0 0.0
    %1066 = vmatprep.subr.mxu0 0.0
    %1067 = vmatpush1.msra.mxu0 0.0
    %1068 = vmatprep.subr.mxu0 0.0
    %1069 = vmatpush1.msra.mxu0 0.0
    %1070 = vmatprep.mubr.f32.mxu0 0.0
    %1071 = vmatmul.mubr.f32.gmra.mrb[0].mxu0 %v1001
    %v1072 = vpop.f32.mrb[0].mxu0
    %v1073 = vadd.f32 %v998, %v1072
    %v1074 = vpop.f32.mrb[0].mxu0
    %1075 = vmatprep.mubr.f32.mxu0 0.0
    %1076 = vmatmul.mubr.f32.gmra.mrb[0].mxu0 %v1004
    %v1077 = vpop.f32.mrb[0].mxu0
    %v1078 = vadd.f32 %v998, %v1077
    %v1079 = vpop.f32.mrb[0].mxu0
    %1080 = vdwg.mxu0
    %1081 = vst [vmem:[#allocation3] sm:$0xff] %v1073
    %1082 = vst [vmem:[#allocation3 + $0x8] sm:$0xff] %v1078
    %v1083 = vld [vmem:[#allocation6] sm:$0xff]
    %v1084 = vld [vmem:[#allocation6 + $0x8] sm:$0xff]
    %v1085 = vld [vmem:[#allocation6 + $0x10] sm:$0xff]
    %v1086 = vld [vmem:[#allocation6 + $0x18] sm:$0xff]
    %v1087 = vld [vmem:[#allocation3] sm:$0x3]
    %1088 = vmatprep.subr.mxu0 0.0
    %1089 = vmatpush1.msra.mxu0 %v1083
    %1090 = vmatprep.subr.mxu0 0.0
    %1091 = vmatpush1.msra.mxu0 %v1084
    %1092 = vmatprep.subr.mxu0 0.0
    %1093 = vmatpush1.msra.mxu0 %v1085
    %1094 = vmatprep.subr.mxu0 0.0
    %1095 = vmatpush1.msra.mxu0 %v1086
    %1096 = vmatprep.subr.mxu0 0.0
    %1097 = vmatpush1.msra.mxu0 0.0
    %1098 = vmatprep.subr.mxu0 0.0
    %1099 = vmatpush1.msra.mxu0 0.0
    %1100 = vmatprep.subr.mxu0 0.0
    %1101 = vmatpush1.msra.mxu0 0.0
    %1102 = vmatprep.subr.mxu0 0.0
    %1103 = vmatpush1.msra.mxu0 0.0
    %1104 = vmatprep.subr.mxu0 0.0
    %1105 = vmatpush1.msra.mxu0 0.0
    %1106 = vmatprep.subr.mxu0 0.0
    %1107 = vmatpush1.msra.mxu0 0.0
    %1108 = vmatprep.subr.mxu0 0.0
    %1109 = vmatpush1.msra.mxu0 0.0
    %1110 = vmatprep.subr.mxu0 0.0
    %1111 = vmatpush1.msra.mxu0 0.0
    %1112 = vmatprep.subr.mxu0 0.0
    %1113 = vmatpush1.msra.mxu0 0.0
    %1114 = vmatprep.subr.mxu0 0.0
    %1115 = vmatpush1.msra.mxu0 0.0
    %1116 = vmatprep.subr.mxu0 0.0
    %1117 = vmatpush1.msra.mxu0 0.0
    %1118 = vmatprep.subr.mxu0 0.0
    %1119 = vmatpush1.msra.mxu0 0.0
    %1120 = vmatprep.subr.mxu0 0.0
    %1121 = vmatpush1.msra.mxu0 0.0
    %1122 = vmatprep.subr.mxu0 0.0
    %1123 = vmatpush1.msra.mxu0 0.0
    %1124 = vmatprep.subr.mxu0 0.0
    %1125 = vmatpush1.msra.mxu0 0.0
    %1126 = vmatprep.subr.mxu0 0.0
    %1127 = vmatpush1.msra.mxu0 0.0
    %1128 = vmatprep.subr.mxu0 0.0
    %1129 = vmatpush1.msra.mxu0 0.0
    %1130 = vmatprep.subr.mxu0 0.0
    %1131 = vmatpush1.msra.mxu0 0.0
    %1132 = vmatprep.subr.mxu0 0.0
    %1133 = vmatpush1.msra.mxu0 0.0
    %1134 = vmatprep.subr.mxu0 0.0
    %1135 = vmatpush1.msra.mxu0 0.0
    %1136 = vmatprep.subr.mxu0 0.0
    %1137 = vmatpush1.msra.mxu0 0.0
    %1138 = vmatprep.subr.mxu0 0.0
    %1139 = vmatpush1.msra.mxu0 0.0
    %1140 = vmatprep.subr.mxu0 0.0
    %1141 = vmatpush1.msra.mxu0 0.0
    %1142 = vmatprep.subr.mxu0 0.0
    %1143 = vmatpush1.msra.mxu0 0.0
    %1144 = vmatprep.subr.mxu0 0.0
    %1145 = vmatpush1.msra.mxu0 0.0
    %1146 = vmatprep.subr.mxu0 0.0
    %1147 = vmatpush1.msra.mxu0 0.0
    %1148 = vmatprep.subr.mxu0 0.0
    %1149 = vmatpush1.msra.mxu0 0.0
    %1150 = vmatprep.subr.mxu0 0.0
    %1151 = vmatpush1.msra.mxu0 0.0
    %1152 = vmatprep.mubr.f32.mxu0 0.0
    %1153 = vmatmul.mubr.f32.gmra.mrb[0].mxu0 %v163
    %v1154 = vpop.f32.mrb[0].mxu0
    %v1155 = vadd.f32 0.0, %v1154
    %v1156 = vpop.f32.mrb[0].mxu0
    %1157 = vdwg.mxu0
    %v1158 = vadd.f32 %v1087, %v1155
    %v1159 = vxor.u32 %v1158, 2147483648
    %v1160 = vmul.f32 %v1159, 1.442695
    %v1161 = vpow.pop %v1160
    %v1162 = vadd.f32 %v1161, 1.0
    %v1163 = vrcp.pop %v1162
    %v1164 = vmul.f32 1.0, %v1163
    %v1165 = vtanh.pop %v1158
    %v1166 = vmul.f32 %v1164, 0.0
    %1168 = vrot.lane.b32.xlu0 %v1165, 64
    %v1169 = vpop.permute.xlu0 %1168
    %v1171 = vmul.f32 %v1164, %v1169
    %1173 = vrot.lane.b32.xlu0 %v1171, 32
    %v1174 = vpop.permute.xlu0 %1173
    %v1176 = vadd.f32 %v1166, %v1174
    %v1177 = vtanh.pop %v1176
    %1179 = vrot.lane.b32.xlu0 %v1177, 64
    %v1180 = vpop.permute.xlu0 %1179
    %v1182 = vmul.f32 %v1164, %v1180
    %1184 = vrot.lane.b32.xlu0 %v1182, 32
    %v1185 = vpop.permute.xlu0 %1184
    %1187 = vst.msk [vmem:[#allocation2] sm:$0x3] %vm264, %v1185
    %v1188 = vld [vmem:[#allocation3 + $0x2] sm:$0x3]
    %v1189 = vsel %vm161, %v1185, 0
    %1191 = vmatprep.subr.mxu0 0.0
    %1192 = vmatpush1.msra.mxu0 %v1083
    %1193 = vmatprep.subr.mxu0 0.0
    %1194 = vmatpush1.msra.mxu0 %v1084
    %1195 = vmatprep.subr.mxu0 0.0
    %1196 = vmatpush1.msra.mxu0 %v1085
    %1197 = vmatprep.subr.mxu0 0.0
    %1198 = vmatpush1.msra.mxu0 %v1086
    %1199 = vmatprep.subr.mxu0 0.0
    %1200 = vmatpush1.msra.mxu0 0.0
    %1201 = vmatprep.subr.mxu0 0.0
    %1202 = vmatpush1.msra.mxu0 0.0
    %1203 = vmatprep.subr.mxu0 0.0
    %1204 = vmatpush1.msra.mxu0 0.0
    %1205 = vmatprep.subr.mxu0 0.0
    %1206 = vmatpush1.msra.mxu0 0.0
    %1207 = vmatprep.subr.mxu0 0.0
    %1208 = vmatpush1.msra.mxu0 0.0
    %1209 = vmatprep.subr.mxu0 0.0
    %1210 = vmatpush1.msra.mxu0 0.0
    %1211 = vmatprep.subr.mxu0 0.0
    %1212 = vmatpush1.msra.mxu0 0.0
    %1213 = vmatprep.subr.mxu0 0.0
    %1214 = vmatpush1.msra.mxu0 0.0
    %1215 = vmatprep.subr.mxu0 0.0
    %1216 = vmatpush1.msra.mxu0 0.0
    %1217 = vmatprep.subr.mxu0 0.0
    %1218 = vmatpush1.msra.mxu0 0.0
    %1219 = vmatprep.subr.mxu0 0.0
    %1220 = vmatpush1.msra.mxu0 0.0
    %1221 = vmatprep.subr.mxu0 0.0
    %1222 = vmatpush1.msra.mxu0 0.0
    %1223 = vmatprep.subr.mxu0 0.0
    %1224 = vmatpush1.msra.mxu0 0.0
    %1225 = vmatprep.subr.mxu0 0.0
    %1226 = vmatpush1.msra.mxu0 0.0
    %1227 = vmatprep.subr.mxu0 0.0
    %1228 = vmatpush1.msra.mxu0 0.0
    %1229 = vmatprep.subr.mxu0 0.0
    %1230 = vmatpush1.msra.mxu0 0.0
    %1231 = vmatprep.subr.mxu0 0.0
    %1232 = vmatpush1.msra.mxu0 0.0
    %1233 = vmatprep.subr.mxu0 0.0
    %1234 = vmatpush1.msra.mxu0 0.0
    %1235 = vmatprep.subr.mxu0 0.0
    %1236 = vmatpush1.msra.mxu0 0.0
    %1237 = vmatprep.subr.mxu0 0.0
    %1238 = vmatpush1.msra.mxu0 0.0
    %1239 = vmatprep.subr.mxu0 0.0
    %1240 = vmatpush1.msra.mxu0 0.0
    %1241 = vmatprep.subr.mxu0 0.0
    %1242 = vmatpush1.msra.mxu0 0.0
    %1243 = vmatprep.subr.mxu0 0.0
    %1244 = vmatpush1.msra.mxu0 0.0
    %1245 = vmatprep.subr.mxu0 0.0
    %1246 = vmatpush1.msra.mxu0 0.0
    %1247 = vmatprep.subr.mxu0 0.0
    %1248 = vmatpush1.msra.mxu0 0.0
    %1249 = vmatprep.subr.mxu0 0.0
    %1250 = vmatpush1.msra.mxu0 0.0
    %1251 = vmatprep.subr.mxu0 0.0
    %1252 = vmatpush1.msra.mxu0 0.0
    %1253 = vmatprep.subr.mxu0 0.0
    %1254 = vmatpush1.msra.mxu0 0.0
    %1255 = vmatprep.mubr.f32.mxu0 0.0
    %1256 = vmatmul.mubr.f32.gmra.mrb[0].mxu0 %v1189
    %v1257 = vpop.f32.mrb[0].mxu0
    %v1258 = vadd.f32 0.0, %v1257
    %v1259 = vpop.f32.mrb[0].mxu0
    %1260 = vdwg.mxu0
    %v1261 = vadd.f32 %v1188, %v1258
    %v1262 = vxor.u32 %v1261, 2147483648
    %v1263 = vmul.f32 %v1262, 1.442695
    %v1264 = vpow.pop %v1263
    %v1265 = vadd.f32 %v1264, 1.0
    %v1266 = vrcp.pop %v1265
    %v1267 = vmul.f32 1.0, %v1266
    %v1268 = vtanh.pop %v1261
    %v1269 = vmul.f32 %v1267, %v1176
    %1271 = vrot.lane.b32.xlu0 %v1268, 64
    %v1272 = vpop.permute.xlu0 %1271
    %v1274 = vmul.f32 %v1267, %v1272
    %1276 = vrot.lane.b32.xlu0 %v1274, 32
    %v1277 = vpop.permute.xlu0 %1276
    %v1279 = vadd.f32 %v1269, %v1277
    %v1280 = vtanh.pop %v1279
    %1282 = vrot.lane.b32.xlu0 %v1280, 64
    %v1283 = vpop.permute.xlu0 %1282
    %v1285 = vmul.f32 %v1267, %v1283
    %1287 = vrot.lane.b32.xlu0 %v1285, 32
    %v1288 = vpop.permute.xlu0 %1287
    %1290 = vst.msk [vmem:[#allocation2 + $0x2] sm:$0x3] %vm264, %v1288
    %v1291 = vld [vmem:[#allocation3 + $0x4] sm:$0x3]
    %v1292 = vsel %vm161, %v1288, 0
    %1294 = vmatprep.subr.mxu0 0.0
    %1295 = vmatpush1.msra.mxu0 %v1083
    %1296 = vmatprep.subr.mxu0 0.0
    %1297 = vmatpush1.msra.mxu0 %v1084
    %1298 = vmatprep.subr.mxu0 0.0
    %1299 = vmatpush1.msra.mxu0 %v1085
    %1300 = vmatprep.subr.mxu0 0.0
    %1301 = vmatpush1.msra.mxu0 %v1086
    %1302 = vmatprep.subr.mxu0 0.0
    %1303 = vmatpush1.msra.mxu0 0.0
    %1304 = vmatprep.subr.mxu0 0.0
    %1305 = vmatpush1.msra.mxu0 0.0
    %1306 = vmatprep.subr.mxu0 0.0
    %1307 = vmatpush1.msra.mxu0 0.0
    %1308 = vmatprep.subr.mxu0 0.0
    %1309 = vmatpush1.msra.mxu0 0.0
    %1310 = vmatprep.subr.mxu0 0.0
    %1311 = vmatpush1.msra.mxu0 0.0
    %1312 = vmatprep.subr.mxu0 0.0
    %1313 = vmatpush1.msra.mxu0 0.0
    %1314 = vmatprep.subr.mxu0 0.0
    %1315 = vmatpush1.msra.mxu0 0.0
    %1316 = vmatprep.subr.mxu0 0.0
    %1317 = vmatpush1.msra.mxu0 0.0
    %1318 = vmatprep.subr.mxu0 0.0
    %1319 = vmatpush1.msra.mxu0 0.0
    %1320 = vmatprep.subr.mxu0 0.0
    %1321 = vmatpush1.msra.mxu0 0.0
    %1322 = vmatprep.subr.mxu0 0.0
    %1323 = vmatpush1.msra.mxu0 0.0
    %1324 = vmatprep.subr.mxu0 0.0
    %1325 = vmatpush1.msra.mxu0 0.0
    %1326 = vmatprep.subr.mxu0 0.0
    %1327 = vmatpush1.msra.mxu0 0.0
    %1328 = vmatprep.subr.mxu0 0.0
    %1329 = vmatpush1.msra.mxu0 0.0
    %1330 = vmatprep.subr.mxu0 0.0
    %1331 = vmatpush1.msra.mxu0 0.0
    %1332 = vmatprep.subr.mxu0 0.0
    %1333 = vmatpush1.msra.mxu0 0.0
    %1334 = vmatprep.subr.mxu0 0.0
    %1335 = vmatpush1.msra.mxu0 0.0
    %1336 = vmatprep.subr.mxu0 0.0
    %1337 = vmatpush1.msra.mxu0 0.0
    %1338 = vmatprep.subr.mxu0 0.0
    %1339 = vmatpush1.msra.mxu0 0.0
    %1340 = vmatprep.subr.mxu0 0.0
    %1341 = vmatpush1.msra.mxu0 0.0
    %1342 = vmatprep.subr.mxu0 0.0
    %1343 = vmatpush1.msra.mxu0 0.0
    %1344 = vmatprep.subr.mxu0 0.0
    %1345 = vmatpush1.msra.mxu0 0.0
    %1346 = vmatprep.subr.mxu0 0.0
    %1347 = vmatpush1.msra.mxu0 0.0
    %1348 = vmatprep.subr.mxu0 0.0
    %1349 = vmatpush1.msra.mxu0 0.0
    %1350 = vmatprep.subr.mxu0 0.0
    %1351 = vmatpush1.msra.mxu0 0.0
    %1352 = vmatprep.subr.mxu0 0.0
    %1353 = vmatpush1.msra.mxu0 0.0
    %1354 = vmatprep.subr.mxu0 0.0
    %1355 = vmatpush1.msra.mxu0 0.0
    %1356 = vmatprep.subr.mxu0 0.0
    %1357 = vmatpush1.msra.mxu0 0.0
    %1358 = vmatprep.mubr.f32.mxu0 0.0
    %1359 = vmatmul.mubr.f32.gmra.mrb[0].mxu0 %v1292
    %v1360 = vpop.f32.mrb[0].mxu0
    %v1361 = vadd.f32 0.0, %v1360
    %v1362 = vpop.f32.mrb[0].mxu0
    %1363 = vdwg.mxu0
    %v1364 = vadd.f32 %v1291, %v1361
    %v1365 = vxor.u32 %v1364, 2147483648
    %v1366 = vmul.f32 %v1365, 1.442695
    %v1367 = vpow.pop %v1366
    %v1368 = vadd.f32 %v1367, 1.0
    %v1369 = vrcp.pop %v1368
    %v1370 = vmul.f32 1.0, %v1369
    %v1371 = vtanh.pop %v1364
    %v1372 = vmul.f32 %v1370, %v1279
    %1374 = vrot.lane.b32.xlu0 %v1371, 64
    %v1375 = vpop.permute.xlu0 %1374
    %v1377 = vmul.f32 %v1370, %v1375
    %1379 = vrot.lane.b32.xlu0 %v1377, 32
    %v1380 = vpop.permute.xlu0 %1379
    %v1382 = vadd.f32 %v1372, %v1380
    %v1383 = vtanh.pop %v1382
    %1385 = vrot.lane.b32.xlu0 %v1383, 64
    %v1386 = vpop.permute.xlu0 %1385
    %v1388 = vmul.f32 %v1370, %v1386
    %1390 = vrot.lane.b32.xlu0 %v1388, 32
    %v1391 = vpop.permute.xlu0 %1390
    %1393 = vst.msk [vmem:[#allocation2 + $0x4] sm:$0x3] %vm264, %v1391
    %v1394 = vld [vmem:[#allocation3 + $0x6] sm:$0x3]
    %v1395 = vsel %vm161, %v1391, 0
    %1397 = vmatprep.subr.mxu0 0.0
    %1398 = vmatpush1.msra.mxu0 %v1083
    %1399 = vmatprep.subr.mxu0 0.0
    %1400 = vmatpush1.msra.mxu0 %v1084
    %1401 = vmatprep.subr.mxu0 0.0
    %1402 = vmatpush1.msra.mxu0 %v1085
    %1403 = vmatprep.subr.mxu0 0.0
    %1404 = vmatpush1.msra.mxu0 %v1086
    %1405 = vmatprep.subr.mxu0 0.0
    %1406 = vmatpush1.msra.mxu0 0.0
    %1407 = vmatprep.subr.mxu0 0.0
    %1408 = vmatpush1.msra.mxu0 0.0
    %1409 = vmatprep.subr.mxu0 0.0
    %1410 = vmatpush1.msra.mxu0 0.0
    %1411 = vmatprep.subr.mxu0 0.0
    %1412 = vmatpush1.msra.mxu0 0.0
    %1413 = vmatprep.subr.mxu0 0.0
    %1414 = vmatpush1.msra.mxu0 0.0
    %1415 = vmatprep.subr.mxu0 0.0
    %1416 = vmatpush1.msra.mxu0 0.0
    %1417 = vmatprep.subr.mxu0 0.0
    %1418 = vmatpush1.msra.mxu0 0.0
    %1419 = vmatprep.subr.mxu0 0.0
    %1420 = vmatpush1.msra.mxu0 0.0
    %1421 = vmatprep.subr.mxu0 0.0
    %1422 = vmatpush1.msra.mxu0 0.0
    %1423 = vmatprep.subr.mxu0 0.0
    %1424 = vmatpush1.msra.mxu0 0.0
    %1425 = vmatprep.subr.mxu0 0.0
    %1426 = vmatpush1.msra.mxu0 0.0
    %1427 = vmatprep.subr.mxu0 0.0
    %1428 = vmatpush1.msra.mxu0 0.0
    %1429 = vmatprep.subr.mxu0 0.0
    %1430 = vmatpush1.msra.mxu0 0.0
    %1431 = vmatprep.subr.mxu0 0.0
    %1432 = vmatpush1.msra.mxu0 0.0
    %1433 = vmatprep.subr.mxu0 0.0
    %1434 = vmatpush1.msra.mxu0 0.0
    %1435 = vmatprep.subr.mxu0 0.0
    %1436 = vmatpush1.msra.mxu0 0.0
    %1437 = vmatprep.subr.mxu0 0.0
    %1438 = vmatpush1.msra.mxu0 0.0
    %1439 = vmatprep.subr.mxu0 0.0
    %1440 = vmatpush1.msra.mxu0 0.0
    %1441 = vmatprep.subr.mxu0 0.0
    %1442 = vmatpush1.msra.mxu0 0.0
    %1443 = vmatprep.subr.mxu0 0.0
    %1444 = vmatpush1.msra.mxu0 0.0
    %1445 = vmatprep.subr.mxu0 0.0
    %1446 = vmatpush1.msra.mxu0 0.0
    %1447 = vmatprep.subr.mxu0 0.0
    %1448 = vmatpush1.msra.mxu0 0.0
    %1449 = vmatprep.subr.mxu0 0.0
    %1450 = vmatpush1.msra.mxu0 0.0
    %1451 = vmatprep.subr.mxu0 0.0
    %1452 = vmatpush1.msra.mxu0 0.0
    %1453 = vmatprep.subr.mxu0 0.0
    %1454 = vmatpush1.msra.mxu0 0.0
    %1455 = vmatprep.subr.mxu0 0.0
    %1456 = vmatpush1.msra.mxu0 0.0
    %1457 = vmatprep.subr.mxu0 0.0
    %1458 = vmatpush1.msra.mxu0 0.0
    %1459 = vmatprep.subr.mxu0 0.0
    %1460 = vmatpush1.msra.mxu0 0.0
    %1461 = vmatprep.mubr.f32.mxu0 0.0
    %1462 = vmatmul.mubr.f32.gmra.mrb[0].mxu0 %v1395
    %v1463 = vpop.f32.mrb[0].mxu0
    %v1464 = vadd.f32 0.0, %v1463
    %v1465 = vpop.f32.mrb[0].mxu0
    %1466 = vdwg.mxu0
    %v1467 = vadd.f32 %v1394, %v1464
    %v1468 = vxor.u32 %v1467, 2147483648
    %v1469 = vmul.f32 %v1468, 1.442695
    %v1470 = vpow.pop %v1469
    %v1471 = vadd.f32 %v1470, 1.0
    %v1472 = vrcp.pop %v1471
    %v1473 = vmul.f32 1.0, %v1472
    %v1474 = vtanh.pop %v1467
    %v1475 = vmul.f32 %v1473, %v1382
    %1477 = vrot.lane.b32.xlu0 %v1474, 64
    %v1478 = vpop.permute.xlu0 %1477
    %v1480 = vmul.f32 %v1473, %v1478
    %1482 = vrot.lane.b32.xlu0 %v1480, 32
    %v1483 = vpop.permute.xlu0 %1482
    %v1485 = vadd.f32 %v1475, %v1483
    %v1486 = vtanh.pop %v1485
    %1488 = vrot.lane.b32.xlu0 %v1486, 64
    %v1489 = vpop.permute.xlu0 %1488
    %v1491 = vmul.f32 %v1473, %v1489
    %1493 = vrot.lane.b32.xlu0 %v1491, 32
    %v1494 = vpop.permute.xlu0 %1493
    %1496 = vst.msk [vmem:[#allocation2 + $0x6] sm:$0x3] %vm264, %v1494
    %v1497 = vld [vmem:[#allocation3 + $0x8] sm:$0x3]
    %v1498 = vsel %vm161, %v1494, 0
    %1500 = vmatprep.subr.mxu0 0.0
    %1501 = vmatpush1.msra.mxu0 %v1083
    %1502 = vmatprep.subr.mxu0 0.0
    %1503 = vmatpush1.msra.mxu0 %v1084
    %1504 = vmatprep.subr.mxu0 0.0
    %1505 = vmatpush1.msra.mxu0 %v1085
    %1506 = vmatprep.subr.mxu0 0.0
    %1507 = vmatpush1.msra.mxu0 %v1086
    %1508 = vmatprep.subr.mxu0 0.0
    %1509 = vmatpush1.msra.mxu0 0.0
    %1510 = vmatprep.subr.mxu0 0.0
    %1511 = vmatpush1.msra.mxu0 0.0
    %1512 = vmatprep.subr.mxu0 0.0
    %1513 = vmatpush1.msra.mxu0 0.0
    %1514 = vmatprep.subr.mxu0 0.0
    %1515 = vmatpush1.msra.mxu0 0.0
    %1516 = vmatprep.subr.mxu0 0.0
    %1517 = vmatpush1.msra.mxu0 0.0
    %1518 = vmatprep.subr.mxu0 0.0
    %1519 = vmatpush1.msra.mxu0 0.0
    %1520 = vmatprep.subr.mxu0 0.0
    %1521 = vmatpush1.msra.mxu0 0.0
    %1522 = vmatprep.subr.mxu0 0.0
    %1523 = vmatpush1.msra.mxu0 0.0
    %1524 = vmatprep.subr.mxu0 0.0
    %1525 = vmatpush1.msra.mxu0 0.0
    %1526 = vmatprep.subr.mxu0 0.0
    %1527 = vmatpush1.msra.mxu0 0.0
    %1528 = vmatprep.subr.mxu0 0.0
    %1529 = vmatpush1.msra.mxu0 0.0
    %1530 = vmatprep.subr.mxu0 0.0
    %1531 = vmatpush1.msra.mxu0 0.0
    %1532 = vmatprep.subr.mxu0 0.0
    %1533 = vmatpush1.msra.mxu0 0.0
    %1534 = vmatprep.subr.mxu0 0.0
    %1535 = vmatpush1.msra.mxu0 0.0
    %1536 = vmatprep.subr.mxu0 0.0
    %1537 = vmatpush1.msra.mxu0 0.0
    %1538 = vmatprep.subr.mxu0 0.0
    %1539 = vmatpush1.msra.mxu0 0.0
    %1540 = vmatprep.subr.mxu0 0.0
    %1541 = vmatpush1.msra.mxu0 0.0
    %1542 = vmatprep.subr.mxu0 0.0
    %1543 = vmatpush1.msra.mxu0 0.0
    %1544 = vmatprep.subr.mxu0 0.0
    %1545 = vmatpush1.msra.mxu0 0.0
    %1546 = vmatprep.subr.mxu0 0.0
    %1547 = vmatpush1.msra.mxu0 0.0
    %1548 = vmatprep.subr.mxu0 0.0
    %1549 = vmatpush1.msra.mxu0 0.0
    %1550 = vmatprep.subr.mxu0 0.0
    %1551 = vmatpush1.msra.mxu0 0.0
    %1552 = vmatprep.subr.mxu0 0.0
    %1553 = vmatpush1.msra.mxu0 0.0
    %1554 = vmatprep.subr.mxu0 0.0
    %1555 = vmatpush1.msra.mxu0 0.0
    %1556 = vmatprep.subr.mxu0 0.0
    %1557 = vmatpush1.msra.mxu0 0.0
    %1558 = vmatprep.subr.mxu0 0.0
    %1559 = vmatpush1.msra.mxu0 0.0
    %1560 = vmatprep.subr.mxu0 0.0
    %1561 = vmatpush1.msra.mxu0 0.0
    %1562 = vmatprep.subr.mxu0 0.0
    %1563 = vmatpush1.msra.mxu0 0.0
    %1564 = vmatprep.mubr.f32.mxu0 0.0
    %1565 = vmatmul.mubr.f32.gmra.mrb[0].mxu0 %v1498
    %v1566 = vpop.f32.mrb[0].mxu0
    %v1567 = vadd.f32 0.0, %v1566
    %v1568 = vpop.f32.mrb[0].mxu0
    %1569 = vdwg.mxu0
    %v1570 = vadd.f32 %v1497, %v1567
    %v1571 = vxor.u32 %v1570, 2147483648
    %v1572 = vmul.f32 %v1571, 1.442695
    %v1573 = vpow.pop %v1572
    %v1574 = vadd.f32 %v1573, 1.0
    %v1575 = vrcp.pop %v1574
    %v1576 = vmul.f32 1.0, %v1575
    %v1577 = vtanh.pop %v1570
    %v1578 = vmul.f32 %v1576, %v1485
    %1580 = vrot.lane.b32.xlu0 %v1577, 64
    %v1581 = vpop.permute.xlu0 %1580
    %v1583 = vmul.f32 %v1576, %v1581
    %1585 = vrot.lane.b32.xlu0 %v1583, 32
    %v1586 = vpop.permute.xlu0 %1585
    %v1588 = vadd.f32 %v1578, %v1586
    %v1589 = vtanh.pop %v1588
    %1591 = vrot.lane.b32.xlu0 %v1589, 64
    %v1592 = vpop.permute.xlu0 %1591
    %v1594 = vmul.f32 %v1576, %v1592
    %1596 = vrot.lane.b32.xlu0 %v1594, 32
    %v1597 = vpop.permute.xlu0 %1596
    %1599 = vst.msk [vmem:[#allocation2 + $0x8] sm:$0x3] %vm264, %v1597
    %v1600 = vld [vmem:[#allocation3 + $0xa] sm:$0x3]
    %v1601 = vsel %vm161, %v1597, 0
    %1603 = vmatprep.subr.mxu0 0.0
    %1604 = vmatpush1.msra.mxu0 %v1083
    %1605 = vmatprep.subr.mxu0 0.0
    %1606 = vmatpush1.msra.mxu0 %v1084
    %1607 = vmatprep.subr.mxu0 0.0
    %1608 = vmatpush1.msra.mxu0 %v1085
    %1609 = vmatprep.subr.mxu0 0.0
    %1610 = vmatpush1.msra.mxu0 %v1086
    %1611 = vmatprep.subr.mxu0 0.0
    %1612 = vmatpush1.msra.mxu0 0.0
    %1613 = vmatprep.subr.mxu0 0.0
    %1614 = vmatpush1.msra.mxu0 0.0
    %1615 = vmatprep.subr.mxu0 0.0
    %1616 = vmatpush1.msra.mxu0 0.0
    %1617 = vmatprep.subr.mxu0 0.0
    %1618 = vmatpush1.msra.mxu0 0.0
    %1619 = vmatprep.subr.mxu0 0.0
    %1620 = vmatpush1.msra.mxu0 0.0
    %1621 = vmatprep.subr.mxu0 0.0
    %1622 = vmatpush1.msra.mxu0 0.0
    %1623 = vmatprep.subr.mxu0 0.0
    %1624 = vmatpush1.msra.mxu0 0.0
    %1625 = vmatprep.subr.mxu0 0.0
    %1626 = vmatpush1.msra.mxu0 0.0
    %1627 = vmatprep.subr.mxu0 0.0
    %1628 = vmatpush1.msra.mxu0 0.0
    %1629 = vmatprep.subr.mxu0 0.0
    %1630 = vmatpush1.msra.mxu0 0.0
    %1631 = vmatprep.subr.mxu0 0.0
    %1632 = vmatpush1.msra.mxu0 0.0
    %1633 = vmatprep.subr.mxu0 0.0
    %1634 = vmatpush1.msra.mxu0 0.0
    %1635 = vmatprep.subr.mxu0 0.0
    %1636 = vmatpush1.msra.mxu0 0.0
    %1637 = vmatprep.subr.mxu0 0.0
    %1638 = vmatpush1.msra.mxu0 0.0
    %1639 = vmatprep.subr.mxu0 0.0
    %1640 = vmatpush1.msra.mxu0 0.0
    %1641 = vmatprep.subr.mxu0 0.0
    %1642 = vmatpush1.msra.mxu0 0.0
    %1643 = vmatprep.subr.mxu0 0.0
    %1644 = vmatpush1.msra.mxu0 0.0
    %1645 = vmatprep.subr.mxu0 0.0
    %1646 = vmatpush1.msra.mxu0 0.0
    %1647 = vmatprep.subr.mxu0 0.0
    %1648 = vmatpush1.msra.mxu0 0.0
    %1649 = vmatprep.subr.mxu0 0.0
    %1650 = vmatpush1.msra.mxu0 0.0
    %1651 = vmatprep.subr.mxu0 0.0
    %1652 = vmatpush1.msra.mxu0 0.0
    %1653 = vmatprep.subr.mxu0 0.0
    %1654 = vmatpush1.msra.mxu0 0.0
    %1655 = vmatprep.subr.mxu0 0.0
    %1656 = vmatpush1.msra.mxu0 0.0
    %1657 = vmatprep.subr.mxu0 0.0
    %1658 = vmatpush1.msra.mxu0 0.0
    %1659 = vmatprep.subr.mxu0 0.0
    %1660 = vmatpush1.msra.mxu0 0.0
    %1661 = vmatprep.subr.mxu0 0.0
    %1662 = vmatpush1.msra.mxu0 0.0
    %1663 = vmatprep.subr.mxu0 0.0
    %1664 = vmatpush1.msra.mxu0 0.0
    %1665 = vmatprep.subr.mxu0 0.0
    %1666 = vmatpush1.msra.mxu0 0.0
    %1667 = vmatprep.mubr.f32.mxu0 0.0
    %1668 = vmatmul.mubr.f32.gmra.mrb[0].mxu0 %v1601
    %v1669 = vpop.f32.mrb[0].mxu0
    %v1670 = vadd.f32 0.0, %v1669
    %v1671 = vpop.f32.mrb[0].mxu0
    %1672 = vdwg.mxu0
    %v1673 = vadd.f32 %v1600, %v1670
    %v1674 = vxor.u32 %v1673, 2147483648
    %v1675 = vmul.f32 %v1674, 1.442695
    %v1676 = vpow.pop %v1675
    %v1677 = vadd.f32 %v1676, 1.0
    %v1678 = vrcp.pop %v1677
    %v1679 = vmul.f32 1.0, %v1678
    %v1680 = vtanh.pop %v1673
    %v1681 = vmul.f32 %v1679, %v1588
    %1683 = vrot.lane.b32.xlu0 %v1680, 64
    %v1684 = vpop.permute.xlu0 %1683
    %v1686 = vmul.f32 %v1679, %v1684
    %1688 = vrot.lane.b32.xlu0 %v1686, 32
    %v1689 = vpop.permute.xlu0 %1688
    %v1691 = vadd.f32 %v1681, %v1689
    %v1692 = vtanh.pop %v1691
    %1694 = vrot.lane.b32.xlu0 %v1692, 64
    %v1695 = vpop.permute.xlu0 %1694
    %v1697 = vmul.f32 %v1679, %v1695
    %1699 = vrot.lane.b32.xlu0 %v1697, 32
    %v1700 = vpop.permute.xlu0 %1699
    %1702 = vst.msk [vmem:[#allocation2 + $0xa] sm:$0x3] %vm264, %v1700
    %v1703 = vld [vmem:[#allocation3 + $0xc] sm:$0x3]
    %v1704 = vsel %vm161, %v1700, 0
    %1706 = vmatprep.subr.mxu0 0.0
    %1707 = vmatpush1.msra.mxu0 %v1083
    %1708 = vmatprep.subr.mxu0 0.0
    %1709 = vmatpush1.msra.mxu0 %v1084
    %1710 = vmatprep.subr.mxu0 0.0
    %1711 = vmatpush1.msra.mxu0 %v1085
    %1712 = vmatprep.subr.mxu0 0.0
    %1713 = vmatpush1.msra.mxu0 %v1086
    %1714 = vmatprep.subr.mxu0 0.0
    %1715 = vmatpush1.msra.mxu0 0.0
    %1716 = vmatprep.subr.mxu0 0.0
    %1717 = vmatpush1.msra.mxu0 0.0
    %1718 = vmatprep.subr.mxu0 0.0
    %1719 = vmatpush1.msra.mxu0 0.0
    %1720 = vmatprep.subr.mxu0 0.0
    %1721 = vmatpush1.msra.mxu0 0.0
    %1722 = vmatprep.subr.mxu0 0.0
    %1723 = vmatpush1.msra.mxu0 0.0
    %1724 = vmatprep.subr.mxu0 0.0
    %1725 = vmatpush1.msra.mxu0 0.0
    %1726 = vmatprep.subr.mxu0 0.0
    %1727 = vmatpush1.msra.mxu0 0.0
    %1728 = vmatprep.subr.mxu0 0.0
    %1729 = vmatpush1.msra.mxu0 0.0
    %1730 = vmatprep.subr.mxu0 0.0
    %1731 = vmatpush1.msra.mxu0 0.0
    %1732 = vmatprep.subr.mxu0 0.0
    %1733 = vmatpush1.msra.mxu0 0.0
    %1734 = vmatprep.subr.mxu0 0.0
    %1735 = vmatpush1.msra.mxu0 0.0
    %1736 = vmatprep.subr.mxu0 0.0
    %1737 = vmatpush1.msra.mxu0 0.0
    %1738 = vmatprep.subr.mxu0 0.0
    %1739 = vmatpush1.msra.mxu0 0.0
    %1740 = vmatprep.subr.mxu0 0.0
    %1741 = vmatpush1.msra.mxu0 0.0
    %1742 = vmatprep.subr.mxu0 0.0
    %1743 = vmatpush1.msra.mxu0 0.0
    %1744 = vmatprep.subr.mxu0 0.0
    %1745 = vmatpush1.msra.mxu0 0.0
    %1746 = vmatprep.subr.mxu0 0.0
    %1747 = vmatpush1.msra.mxu0 0.0
    %1748 = vmatprep.subr.mxu0 0.0
    %1749 = vmatpush1.msra.mxu0 0.0
    %1750 = vmatprep.subr.mxu0 0.0
    %1751 = vmatpush1.msra.mxu0 0.0
    %1752 = vmatprep.subr.mxu0 0.0
    %1753 = vmatpush1.msra.mxu0 0.0
    %1754 = vmatprep.subr.mxu0 0.0
    %1755 = vmatpush1.msra.mxu0 0.0
    %1756 = vmatprep.subr.mxu0 0.0
    %1757 = vmatpush1.msra.mxu0 0.0
    %1758 = vmatprep.subr.mxu0 0.0
    %1759 = vmatpush1.msra.mxu0 0.0
    %1760 = vmatprep.subr.mxu0 0.0
    %1761 = vmatpush1.msra.mxu0 0.0
    %1762 = vmatprep.subr.mxu0 0.0
    %1763 = vmatpush1.msra.mxu0 0.0
    %1764 = vmatprep.subr.mxu0 0.0
    %1765 = vmatpush1.msra.mxu0 0.0
    %1766 = vmatprep.subr.mxu0 0.0
    %1767 = vmatpush1.msra.mxu0 0.0
    %1768 = vmatprep.subr.mxu0 0.0
    %1769 = vmatpush1.msra.mxu0 0.0
    %1770 = vmatprep.mubr.f32.mxu0 0.0
    %1771 = vmatmul.mubr.f32.gmra.mrb[0].mxu0 %v1704
    %v1772 = vpop.f32.mrb[0].mxu0
    %v1773 = vadd.f32 0.0, %v1772
    %v1774 = vpop.f32.mrb[0].mxu0
    %1775 = vdwg.mxu0
    %v1776 = vadd.f32 %v1703, %v1773
    %v1777 = vxor.u32 %v1776, 2147483648
    %v1778 = vmul.f32 %v1777, 1.442695
    %v1779 = vpow.pop %v1778
    %v1780 = vadd.f32 %v1779, 1.0
    %v1781 = vrcp.pop %v1780
    %v1782 = vmul.f32 1.0, %v1781
    %v1783 = vtanh.pop %v1776
    %v1784 = vmul.f32 %v1782, %v1691
    %1786 = vrot.lane.b32.xlu0 %v1783, 64
    %v1787 = vpop.permute.xlu0 %1786
    %v1789 = vmul.f32 %v1782, %v1787
    %1791 = vrot.lane.b32.xlu0 %v1789, 32
    %v1792 = vpop.permute.xlu0 %1791
    %v1794 = vadd.f32 %v1784, %v1792
    %v1795 = vtanh.pop %v1794
    %1797 = vrot.lane.b32.xlu0 %v1795, 64
    %v1798 = vpop.permute.xlu0 %1797
    %v1800 = vmul.f32 %v1782, %v1798
    %1802 = vrot.lane.b32.xlu0 %v1800, 32
    %v1803 = vpop.permute.xlu0 %1802
    %1805 = vst.msk [vmem:[#allocation2 + $0xc] sm:$0x3] %vm264, %v1803
    %v1806 = vld [vmem:[#allocation3 + $0xe] sm:$0x3]
    %v1807 = vsel %vm161, %v1803, 0
    %1809 = vmatprep.subr.mxu0 0.0
    %1810 = vmatpush1.msra.mxu0 %v1083
    %1811 = vmatprep.subr.mxu0 0.0
    %1812 = vmatpush1.msra.mxu0 %v1084
    %1813 = vmatprep.subr.mxu0 0.0
    %1814 = vmatpush1.msra.mxu0 %v1085
    %1815 = vmatprep.subr.mxu0 0.0
    %1816 = vmatpush1.msra.mxu0 %v1086
    %1817 = vmatprep.subr.mxu0 0.0
    %1818 = vmatpush1.msra.mxu0 0.0
    %1819 = vmatprep.subr.mxu0 0.0
    %1820 = vmatpush1.msra.mxu0 0.0
    %1821 = vmatprep.subr.mxu0 0.0
    %1822 = vmatpush1.msra.mxu0 0.0
    %1823 = vmatprep.subr.mxu0 0.0
    %1824 = vmatpush1.msra.mxu0 0.0
    %1825 = vmatprep.subr.mxu0 0.0
    %1826 = vmatpush1.msra.mxu0 0.0
    %1827 = vmatprep.subr.mxu0 0.0
    %1828 = vmatpush1.msra.mxu0 0.0
    %1829 = vmatprep.subr.mxu0 0.0
    %1830 = vmatpush1.msra.mxu0 0.0
    %1831 = vmatprep.subr.mxu0 0.0
    %1832 = vmatpush1.msra.mxu0 0.0
    %1833 = vmatprep.subr.mxu0 0.0
    %1834 = vmatpush1.msra.mxu0 0.0
    %1835 = vmatprep.subr.mxu0 0.0
    %1836 = vmatpush1.msra.mxu0 0.0
    %1837 = vmatprep.subr.mxu0 0.0
    %1838 = vmatpush1.msra.mxu0 0.0
    %1839 = vmatprep.subr.mxu0 0.0
    %1840 = vmatpush1.msra.mxu0 0.0
    %1841 = vmatprep.subr.mxu0 0.0
    %1842 = vmatpush1.msra.mxu0 0.0
    %1843 = vmatprep.subr.mxu0 0.0
    %1844 = vmatpush1.msra.mxu0 0.0
    %1845 = vmatprep.subr.mxu0 0.0
    %1846 = vmatpush1.msra.mxu0 0.0
    %1847 = vmatprep.subr.mxu0 0.0
    %1848 = vmatpush1.msra.mxu0 0.0
    %1849 = vmatprep.subr.mxu0 0.0
    %1850 = vmatpush1.msra.mxu0 0.0
    %1851 = vmatprep.subr.mxu0 0.0
    %1852 = vmatpush1.msra.mxu0 0.0
    %1853 = vmatprep.subr.mxu0 0.0
    %1854 = vmatpush1.msra.mxu0 0.0
    %1855 = vmatprep.subr.mxu0 0.0
    %1856 = vmatpush1.msra.mxu0 0.0
    %1857 = vmatprep.subr.mxu0 0.0
    %1858 = vmatpush1.msra.mxu0 0.0
    %1859 = vmatprep.subr.mxu0 0.0
    %1860 = vmatpush1.msra.mxu0 0.0
    %1861 = vmatprep.subr.mxu0 0.0
    %1862 = vmatpush1.msra.mxu0 0.0
    %1863 = vmatprep.subr.mxu0 0.0
    %1864 = vmatpush1.msra.mxu0 0.0
    %1865 = vmatprep.subr.mxu0 0.0
    %1866 = vmatpush1.msra.mxu0 0.0
    %1867 = vmatprep.subr.mxu0 0.0
    %1868 = vmatpush1.msra.mxu0 0.0
    %1869 = vmatprep.subr.mxu0 0.0
    %1870 = vmatpush1.msra.mxu0 0.0
    %1871 = vmatprep.subr.mxu0 0.0
    %1872 = vmatpush1.msra.mxu0 0.0
    %1873 = vmatprep.mubr.f32.mxu0 0.0
    %1874 = vmatmul.mubr.f32.gmra.mrb[0].mxu0 %v1807
    %v1875 = vpop.f32.mrb[0].mxu0
    %v1876 = vadd.f32 0.0, %v1875
    %v1877 = vpop.f32.mrb[0].mxu0
    %1878 = vdwg.mxu0
    %v1879 = vadd.f32 %v1806, %v1876
    %v1880 = vxor.u32 %v1879, 2147483648
    %v1881 = vmul.f32 %v1880, 1.442695
    %v1882 = vpow.pop %v1881
    %v1883 = vadd.f32 %v1882, 1.0
    %v1884 = vrcp.pop %v1883
    %v1885 = vmul.f32 1.0, %v1884
    %v1886 = vtanh.pop %v1879
    %v1887 = vmul.f32 %v1885, %v1794
    %1889 = vrot.lane.b32.xlu0 %v1886, 64
    %v1890 = vpop.permute.xlu0 %1889
    %v1892 = vmul.f32 %v1885, %v1890
    %1894 = vrot.lane.b32.xlu0 %v1892, 32
    %v1895 = vpop.permute.xlu0 %1894
    %v1897 = vadd.f32 %v1887, %v1895
    %v1898 = vtanh.pop %v1897
    %1900 = vrot.lane.b32.xlu0 %v1898, 64
    %v1901 = vpop.permute.xlu0 %1900
    %v1903 = vmul.f32 %v1885, %v1901
    %1905 = vrot.lane.b32.xlu0 %v1903, 32
    %v1906 = vpop.permute.xlu0 %1905
    %1908 = vst.msk [vmem:[#allocation2 + $0xe] sm:$0x3] %vm264, %v1906
    %v1909 = vld [vmem:[#allocation2] sm:$0xff]
    %v1910 = vld [vmem:[#allocation2 + $0x8] sm:$0xff]
    %v1911 = vld [vmem:[%s7] sm:$0xff]
    %v1912 = vld [vmem:[%s7 + $0x8] sm:$0xff]
    %v1913 = vld [vmem:[%s7 + $0x10] sm:$0xff]
    %v1914 = vld [vmem:[%s7 + $0x18] sm:$0xff]
    %v1915 = vld [vmem:[%s8] sm:$0x1]
    %v1917 = vlaneseq
    %v1918 = vshrl.u32 %v1917, 7
    %v1919 = vsub.s32 0, %v1918
    %v1920 = vrot.slane %v1915, %v1919
    %v1923 = vsel %vm161, %v1909, 0
    %v1926 = vsel %vm161, %v1910, 0
    %1928 = vmatprep.subr.mxu0 0.0
    %1929 = vmatpush1.msra.mxu0 %v1911
    %1930 = vmatprep.subr.mxu0 0.0
    %1931 = vmatpush1.msra.mxu0 %v1912
    %1932 = vmatprep.subr.mxu0 0.0
    %1933 = vmatpush1.msra.mxu0 %v1913
    %1934 = vmatprep.subr.mxu0 0.0
    %1935 = vmatpush1.msra.mxu0 %v1914
    %1936 = vmatprep.subr.mxu0 0.0
    %1937 = vmatpush1.msra.mxu0 0.0
    %1938 = vmatprep.subr.mxu0 0.0
    %1939 = vmatpush1.msra.mxu0 0.0
    %1940 = vmatprep.subr.mxu0 0.0
    %1941 = vmatpush1.msra.mxu0 0.0
    %1942 = vmatprep.subr.mxu0 0.0
    %1943 = vmatpush1.msra.mxu0 0.0
    %1944 = vmatprep.subr.mxu0 0.0
    %1945 = vmatpush1.msra.mxu0 0.0
    %1946 = vmatprep.subr.mxu0 0.0
    %1947 = vmatpush1.msra.mxu0 0.0
    %1948 = vmatprep.subr.mxu0 0.0
    %1949 = vmatpush1.msra.mxu0 0.0
    %1950 = vmatprep.subr.mxu0 0.0
    %1951 = vmatpush1.msra.mxu0 0.0
    %1952 = vmatprep.subr.mxu0 0.0
    %1953 = vmatpush1.msra.mxu0 0.0
    %1954 = vmatprep.subr.mxu0 0.0
    %1955 = vmatpush1.msra.mxu0 0.0
    %1956 = vmatprep.subr.mxu0 0.0
    %1957 = vmatpush1.msra.mxu0 0.0
    %1958 = vmatprep.subr.mxu0 0.0
    %1959 = vmatpush1.msra.mxu0 0.0
    %1960 = vmatprep.subr.mxu0 0.0
    %1961 = vmatpush1.msra.mxu0 0.0
    %1962 = vmatprep.subr.mxu0 0.0
    %1963 = vmatpush1.msra.mxu0 0.0
    %1964 = vmatprep.subr.mxu0 0.0
    %1965 = vmatpush1.msra.mxu0 0.0
    %1966 = vmatprep.subr.mxu0 0.0
    %1967 = vmatpush1.msra.mxu0 0.0
    %1968 = vmatprep.subr.mxu0 0.0
    %1969 = vmatpush1.msra.mxu0 0.0
    %1970 = vmatprep.subr.mxu0 0.0
    %1971 = vmatpush1.msra.mxu0 0.0
    %1972 = vmatprep.subr.mxu0 0.0
    %1973 = vmatpush1.msra.mxu0 0.0
    %1974 = vmatprep.subr.mxu0 0.0
    %1975 = vmatpush1.msra.mxu0 0.0
    %1976 = vmatprep.subr.mxu0 0.0
    %1977 = vmatpush1.msra.mxu0 0.0
    %1978 = vmatprep.subr.mxu0 0.0
    %1979 = vmatpush1.msra.mxu0 0.0
    %1980 = vmatprep.subr.mxu0 0.0
    %1981 = vmatpush1.msra.mxu0 0.0
    %1982 = vmatprep.subr.mxu0 0.0
    %1983 = vmatpush1.msra.mxu0 0.0
    %1984 = vmatprep.subr.mxu0 0.0
    %1985 = vmatpush1.msra.mxu0 0.0
    %1986 = vmatprep.subr.mxu0 0.0
    %1987 = vmatpush1.msra.mxu0 0.0
    %1988 = vmatprep.subr.mxu0 0.0
    %1989 = vmatpush1.msra.mxu0 0.0
    %1990 = vmatprep.subr.mxu0 0.0
    %1991 = vmatpush1.msra.mxu0 0.0
    %1992 = vmatprep.mubr.f32.mxu0 0.0
    %1993 = vmatmul.mubr.f32.gmra.mrb[0].mxu0 %v1923
    %v1994 = vpop.f32.mrb[0].mxu0
    %v1995 = vadd.f32 %v1920, %v1994
    %v1996 = vpop.f32.mrb[0].mxu0
    %1997 = vmatprep.mubr.f32.mxu0 0.0
    %1998 = vmatmul.mubr.f32.gmra.mrb[0].mxu0 %v1926
    %v1999 = vpop.f32.mrb[0].mxu0
    %v2000 = vadd.f32 %v1920, %v1999
    %v2001 = vpop.f32.mrb[0].mxu0
    %2002 = vdwg.mxu0
    %2003 = vst.msk [vmem:[%s9] sm:$0xff] %vm68, %v1995
    %2004 = vst.msk [vmem:[%s9 + $0x8] sm:$0xff] %vm68, %v2000
    // Predicated region
    $region46: #{lstm_net_forward.1} parent=1 // pred_check
      _
    $region47: #{lstm_net_forward.1} parent=1 // pred_check_branch
      %2006 = sbr.rel (0) target = $region49
    $region48: #{lstm_net_forward.1} parent=1 // pred_region
      _
    $region49: #{lstm_net_forward.1} parent=1 // pred_fallthru
      _
    // Predicated region
    $region50: #{lstm_net_forward.1} parent=1 // pred_check
      _
    $region51: #{lstm_net_forward.1} parent=1 // pred_check_branch
      %2008 = sbr.rel (0) target = $region53
    $region52: #{lstm_net_forward.1} parent=1 // pred_region
      _
    $region53: #{lstm_net_forward.1} parent=1 // pred_fallthru
      _
    %2009 = vsyncpa [#allocation5], 1
    %2010 = vsyncpa [#allocation7], 1

</llo_original>
